<compile_context>
chip_gen: v6e
topology: v6e:2x2x1
jax: 0.10.0
libtpu: 0.0.40
codegen_flags: <defaults>
</compile_context>

<pallas_src>
import jax
import jax.numpy as jnp
from jax.experimental import pallas as pl
from jax.experimental.pallas import tpu as pltpu

# ---------------- model hyper-parameters (small, consistent with the module) ----------------
VOCAB = 64          # synthetic vocabulary size (real model uses ZH GloVe vocab)
EMB_D = 32          # embedding dim (real model: 300)
SEQ_L = 16          # max_seq_length (real model: 128)
HIDDEN = 32         # hidden_size / filters per width (real model: 150)
NUM_LABELS = 2
WIDTHS = (3, 4, 5)
BATCH = 2
LABELS_PAD = 128    # lane-dense classifier output width


def _cnn_kernel(emb_ref, wf_ref, bf_ref, mask_ref, wo_ref, bo_ref, out_ref):
    """One batch block per grid step: per-tap accumulated conv + ReLU + masked max pool + linear."""
    bb, _, d = emb_ref.shape               # (bb, lp, D)
    wmax, _, nf = wf_ref.shape             # (wmax, D, NF)
    l_out = mask_ref.shape[0]              # sublane-aligned number of conv positions

    emb = emb_ref[...]                     # (bb, lp, D), MXU dtype (bf16 or f32)

    # Per-tap accumulated conv matmuls (no im2col materialization): for tap i the LHS is
    # the sequence shifted by i, the RHS is the (D, NF) weight slice for tap i (zero for
    # taps beyond a width's kernel and for the zero-padded filters).
    lhs0 = emb[:, 0:l_out, :].reshape(bb * l_out, d)
    acc = jnp.dot(lhs0, wf_ref[0], preferred_element_type=jnp.float32)
    for i in range(1, wmax):               # static loop, wmax = 5
        lhs = emb[:, i:i + l_out, :].reshape(bb * l_out, d)
        acc = acc + jnp.dot(lhs, wf_ref[i], preferred_element_type=jnp.float32)

    # f32 bias + ReLU, then a single vmul with the precomputed 0/1 validity mask.  Masking
    # to 0 after ReLU is exact because the pooled max of ReLU outputs is always >= 0.
    conv = jnp.maximum(acc + bf_ref[...], 0.0)                      # (bb*l_out, NF), f32
    conv = conv.reshape(bb, l_out, nf) * mask_ref[...][None]        # (bb, l_out, NF)

    # Global max pool per batch element, then lane-dense (padded) classifier.
    feat = jnp.max(conv, axis=1)                                    # (bb, NF), f32
    out_ref[...] = jnp.dot(feat.astype(wo_ref.dtype), wo_ref[...],
                           preferred_element_type=jnp.float32) + bo_ref[...]


def pack_params(params, *, max_seq_length=SEQ_L, use_bf16=True):
    """One-time parameter repacking (done at load time, NOT in the per-call path)."""
    emb_d = params["embedding"].shape[1]
    filters = params["w3"].shape[-1]
    num_labels = params["wo"].shape[-1]
    wmin, wmax = min(WIDTHS), max(WIDTHS)
    mxu_dtype = jnp.bfloat16 if use_bf16 else jnp.float32

    nf = pl.cdiv(3 * filters, 128) * 128                            # lane-dense filter count
    l_out = max_seq_length - wmin + 1
    l_out_pad = pl.cdiv(l_out, 8) * 8                               # sublane-aligned positions

    # (wmax, D, NF) per-tap conv weights; zero beyond each width's kernel / padded filters.
    wf = jnp.zeros((wmax, emb_d, nf), jnp.float32)
    bf = jnp.zeros((1, nf), jnp.float32)
    for gi, w in enumerate(WIDTHS):
        col = gi * filters
        wf = wf.at[:w, :, col:col + filters].set(params[f"w{w}"])   # (w, D, F) tap-major
        bf = bf.at[:, col:col + filters].set(params[f"b{w}"])

    # Classifier padded to a 128-lane output and an NF-row (zero-padded) contraction dim.
    wo = jnp.zeros((nf, LABELS_PAD), jnp.float32)
    wo = wo.at[:3 * filters, :num_labels].set(params["wo"])
    bo = jnp.zeros((1, LABELS_PAD), jnp.float32)
    bo = bo.at[:, :num_labels].set(params["bo"])

    # Static 0/1 validity mask: position p is valid for width w iff p < L - w + 1.
    mask = jnp.zeros((l_out_pad, nf), jnp.float32)
    for gi, w in enumerate(WIDTHS):
        mask = mask.at[:max_seq_length - w + 1, gi * filters:(gi + 1) * filters].set(1.0)

    return {
        "embedding": params["embedding"].astype(mxu_dtype),
        "wf": wf.astype(mxu_dtype),
        "bf": bf,                                                   # f32 (VPU path)
        "mask": mask,                                               # f32 (VPU path)
        "wo": wo.astype(mxu_dtype),
        "bo": bo,                                                   # f32 (VPU path)
    }


def zh_word_cnn_forward(input_ids, packed, *, num_labels=NUM_LABELS):
    """Pallas implementation of ZHWordCNNForClassification.forward (eval mode)."""
    # Embedding lookup (plain-JAX glue).
    # TODO(synk): at real model sizes (L=128, D=300) fuse this gather + pad into the kernel
    # via PrefetchScalarGridSpec row-gather / manual DMA to avoid ~3x HBM round trips.
    emb = jnp.take(packed["embedding"], input_ids, axis=0)          # (B, L, D), MXU dtype
    b, seq_len, emb_d = emb.shape
    wmin, wmax = min(WIDTHS), max(WIDTHS)

    mask = packed["mask"]
    l_out_pad, nf = mask.shape
    assert pl.cdiv(seq_len - wmin + 1, 8) * 8 == l_out_pad, "input length != packed length"
    lp = l_out_pad + wmax - 1                                       # rows needed for wmax-tap windows

    # Batch padded to one block per grid step, sequence zero-padded for full windows.
    # bb=8 keeps M = bb*l_out_pad a multiple of 128; at real sizes bump bb to 16 to fill
    # v6e/v7x's 256-row MXU and keep >=2 grid steps so v7x's 2 TensorCores are both used
    # (watch the v7x 64 MiB VMEM budget / vmem_limit_bytes when raising bb).
    bb = 8
    b_pad = pl.cdiv(b, bb) * bb
    emb = jnp.pad(emb, ((0, b_pad - b), (0, lp - seq_len), (0, 0)))

    out = pl.pallas_call(
        _cnn_kernel,
        out_shape=jax.ShapeDtypeStruct((b_pad, LABELS_PAD), jnp.float32),
        grid=(b_pad // bb,),
        in_specs=[
            pl.BlockSpec((bb, lp, emb_d), lambda i: (i, 0, 0)),      # embeddings, per batch block
            pl.BlockSpec((wmax, emb_d, nf), lambda i: (0, 0, 0)),    # per-tap conv weights
            pl.BlockSpec((1, nf), lambda i: (0, 0)),                 # fused conv bias (f32)
            pl.BlockSpec((l_out_pad, nf), lambda i: (0, 0)),         # static validity mask (f32)
            pl.BlockSpec((nf, LABELS_PAD), lambda i: (0, 0)),        # classifier weight (padded)
            pl.BlockSpec((1, LABELS_PAD), lambda i: (0, 0)),         # classifier bias (padded)
        ],
        out_specs=pl.BlockSpec((bb, LABELS_PAD), lambda i: (i, 0)),
        compiler_params=pltpu.CompilerParams(dimension_semantics=("parallel",)),
    )(emb, packed["wf"], packed["bf"], packed["mask"], packed["wo"], packed["bo"])

    return out[:b, :num_labels]                                      # (B, num_labels)


def init_params(key):
    """Deterministic synthetic parameters with the module's shapes (scaled down)."""
    keys = jax.random.split(key, 9)
    params = {}
    params["embedding"] = 0.1 * jax.random.normal(keys[0], (VOCAB, EMB_D), jnp.float32)

    # PyTorch Conv2d(1, F, (w, D)) weight has shape (F, 1, w, D); transpose to (w, D, F).
    for idx, w in enumerate(WIDTHS):
        w_torch = 0.05 * jax.random.normal(keys[1 + idx], (HIDDEN, 1, w, EMB_D), jnp.float32)
        params[f"w{w}"] = jnp.transpose(w_torch[:, 0], (1, 2, 0))    # (w, D, F)
        params[f"b{w}"] = 0.01 * jax.random.normal(keys[4 + idx], (1, HIDDEN), jnp.float32)

    # PyTorch Linear(3F, num_labels) weight is (num_labels, 3F); store transposed.
    wo_torch = 0.05 * jax.random.normal(keys[7], (NUM_LABELS, 3 * HIDDEN), jnp.float32)
    params["wo"] = wo_torch.T                                        # (3F, num_labels)
    params["bo"] = 0.01 * jax.random.normal(keys[8], (1, NUM_LABELS), jnp.float32)
    return params


def reference_forward(input_ids, params):
    """Pure-JAX reference mirroring the PyTorch semantics, for validation."""
    emb = jnp.take(params["embedding"], input_ids, axis=0)           # (B, L, D)
    b, seq_len, _ = emb.shape
    feats = []
    for w in WIDTHS:
        l_out = seq_len - w + 1
        windows = jnp.stack([emb[:, i:i + l_out, :] for i in range(w)], axis=2)  # (B, Lout, w, D)
        conv = jnp.einsum("blwd,wdf->blf", windows, params[f"w{w}"]) + params[f"b{w}"][0]
        conv = jnp.maximum(conv, 0.0)
        feats.append(jnp.max(conv, axis=1))                          # (B, F)
    feat = jnp.concatenate(feats, axis=1)                            # (B, 3F)
    return feat @ params["wo"] + params["bo"]                        # (B, num_labels)


if __name__ == "__main__":
    key = jax.random.PRNGKey(0)
    pkey, ikey = jax.random.split(key)
    params = init_params(pkey)
    input_ids = jax.random.randint(ikey, (BATCH, SEQ_L), 0, VOCAB)   # token ids (B, L)

    ref = jax.block_until_ready(reference_forward(input_ids, params))

    # f32 MXU operands: exact match with the PyTorch-style reference.
    packed_f32 = pack_params(params, max_seq_length=SEQ_L, use_bf16=False)
    logits_f32 = jax.block_until_ready(zh_word_cnn_forward(input_ids, packed_f32))
    assert logits_f32.shape == (BATCH, NUM_LABELS), logits_f32.shape
    assert jnp.allclose(logits_f32, ref, atol=1e-4, rtol=1e-4), (logits_f32, ref)

    # bf16 MXU operands (production setting): looser tolerance, f32 accumulation/elementwise.
    packed_bf16 = pack_params(params, max_seq_length=SEQ_L, use_bf16=True)
    logits_bf16 = jax.block_until_ready(zh_word_cnn_forward(input_ids, packed_bf16))
    assert logits_bf16.shape == (BATCH, NUM_LABELS), logits_bf16.shape
    assert jnp.allclose(logits_bf16, ref, atol=1e-2, rtol=5e-2), (logits_bf16, ref)

    print("KERNEL_OK")
</pallas_src>

<mosaic_0001>
module attributes {stable_mosaic.version = 11 : i64} {
  func.func @_cnn_kernel(%arg0: i32, %arg1: memref<8x20x32xf32, #tpu.memory_space<vmem>>, %arg2: memref<5x32x128xf32, #tpu.memory_space<vmem>>, %arg3: memref<1x128xf32, #tpu.memory_space<vmem>>, %arg4: memref<16x128xf32, #tpu.memory_space<vmem>>, %arg5: memref<128x128xf32, #tpu.memory_space<vmem>>, %arg6: memref<1x128xf32, #tpu.memory_space<vmem>>, %arg7: memref<8x128xf32, #tpu.memory_space<vmem>>) attributes {dimension_semantics = [#tpu.dimension_semantics<parallel>], iteration_bounds = array<i64: 1>, scalar_prefetch = 0 : i64, scratch_operands = 0 : i64, tpu.core_type = #tpu.core_type<tc>, window_params = [{transform_indices = @transform_0, window_bounds = array<i64: 8, 20, 32>}, {pipeline_mode = #tpu.pipeline_mode<synchronous>, transform_indices = @transform_1, window_bounds = array<i64: 5, 32, 128>}, {pipeline_mode = #tpu.pipeline_mode<synchronous>, transform_indices = @transform_2, window_bounds = array<i64: 1, 128>}, {pipeline_mode = #tpu.pipeline_mode<synchronous>, transform_indices = @transform_3, window_bounds = array<i64: 16, 128>}, {pipeline_mode = #tpu.pipeline_mode<synchronous>, transform_indices = @transform_4, window_bounds = array<i64: 128, 128>}, {pipeline_mode = #tpu.pipeline_mode<synchronous>, transform_indices = @transform_5, window_bounds = array<i64: 1, 128>}, {transform_indices = @transform_6, window_bounds = array<i64: 8, 128>}]} {
    %c0 = arith.constant 0 : index
    %c0_0 = arith.constant 0 : index
    %c0_1 = arith.constant 0 : index
    %0 = vector.load %arg1[%c0, %c0_0, %c0_1] : memref<8x20x32xf32, #tpu.memory_space<vmem>>, vector<8x20x32xf32>
    %1 = vector.extract_strided_slice %0 {offsets = [0, 0, 0], sizes = [8, 16, 32], strides = [1, 1, 1]} : vector<8x20x32xf32> to vector<8x16x32xf32>
    %2 = vector.shape_cast %1 : vector<8x16x32xf32> to vector<128x32xf32>
    %c0_2 = arith.constant 0 : index
    %c0_3 = arith.constant 0 : index
    %c0_4 = arith.constant 0 : index
    %3 = vector.load %arg2[%c0_2, %c0_3, %c0_4] : memref<5x32x128xf32, #tpu.memory_space<vmem>>, vector<1x32x128xf32>
    %4 = vector.shape_cast %3 : vector<1x32x128xf32> to vector<32x128xf32>
    %cst = arith.constant dense<0.000000e+00> : vector<128x128xf32>
    %5 = tpu.matmul %2, %4, %cst {dimension_numbers = #tpu.dot_dimension_numbers<[1], [0], [0], [1], [0, 0, 1, 1], [], []>} : vector<128x32xf32>, vector<32x128xf32>, vector<128x128xf32> -> vector<128x128xf32>
    %6 = vector.extract_strided_slice %0 {offsets = [0, 1, 0], sizes = [8, 16, 32], strides = [1, 1, 1]} : vector<8x20x32xf32> to vector<8x16x32xf32>
    %7 = vector.shape_cast %6 : vector<8x16x32xf32> to vector<128x32xf32>
    %c1 = arith.constant 1 : index
    %c0_5 = arith.constant 0 : index
    %c0_6 = arith.constant 0 : index
    %8 = vector.load %arg2[%c1, %c0_5, %c0_6] : memref<5x32x128xf32, #tpu.memory_space<vmem>>, vector<1x32x128xf32>
    %9 = vector.shape_cast %8 : vector<1x32x128xf32> to vector<32x128xf32>
    %cst_7 = arith.constant dense<0.000000e+00> : vector<128x128xf32>
    %10 = tpu.matmul %7, %9, %cst_7 {dimension_numbers = #tpu.dot_dimension_numbers<[1], [0], [0], [1], [0, 0, 1, 1], [], []>} : vector<128x32xf32>, vector<32x128xf32>, vector<128x128xf32> -> vector<128x128xf32>
    %11 = arith.addf %5, %10 : vector<128x128xf32>
    %12 = vector.extract_strided_slice %0 {offsets = [0, 2, 0], sizes = [8, 16, 32], strides = [1, 1, 1]} : vector<8x20x32xf32> to vector<8x16x32xf32>
    %13 = vector.shape_cast %12 : vector<8x16x32xf32> to vector<128x32xf32>
    %c2 = arith.constant 2 : index
    %c0_8 = arith.constant 0 : index
    %c0_9 = arith.constant 0 : index
    %14 = vector.load %arg2[%c2, %c0_8, %c0_9] : memref<5x32x128xf32, #tpu.memory_space<vmem>>, vector<1x32x128xf32>
    %15 = vector.shape_cast %14 : vector<1x32x128xf32> to vector<32x128xf32>
    %cst_10 = arith.constant dense<0.000000e+00> : vector<128x128xf32>
    %16 = tpu.matmul %13, %15, %cst_10 {dimension_numbers = #tpu.dot_dimension_numbers<[1], [0], [0], [1], [0, 0, 1, 1], [], []>} : vector<128x32xf32>, vector<32x128xf32>, vector<128x128xf32> -> vector<128x128xf32>
    %17 = arith.addf %11, %16 : vector<128x128xf32>
    %18 = vector.extract_strided_slice %0 {offsets = [0, 3, 0], sizes = [8, 16, 32], strides = [1, 1, 1]} : vector<8x20x32xf32> to vector<8x16x32xf32>
    %19 = vector.shape_cast %18 : vector<8x16x32xf32> to vector<128x32xf32>
    %c3 = arith.constant 3 : index
    %c0_11 = arith.constant 0 : index
    %c0_12 = arith.constant 0 : index
    %20 = vector.load %arg2[%c3, %c0_11, %c0_12] : memref<5x32x128xf32, #tpu.memory_space<vmem>>, vector<1x32x128xf32>
    %21 = vector.shape_cast %20 : vector<1x32x128xf32> to vector<32x128xf32>
    %cst_13 = arith.constant dense<0.000000e+00> : vector<128x128xf32>
    %22 = tpu.matmul %19, %21, %cst_13 {dimension_numbers = #tpu.dot_dimension_numbers<[1], [0], [0], [1], [0, 0, 1, 1], [], []>} : vector<128x32xf32>, vector<32x128xf32>, vector<128x128xf32> -> vector<128x128xf32>
    %23 = arith.addf %17, %22 : vector<128x128xf32>
    %24 = vector.extract_strided_slice %0 {offsets = [0, 4, 0], sizes = [8, 16, 32], strides = [1, 1, 1]} : vector<8x20x32xf32> to vector<8x16x32xf32>
    %25 = vector.shape_cast %24 : vector<8x16x32xf32> to vector<128x32xf32>
    %c4 = arith.constant 4 : index
    %c0_14 = arith.constant 0 : index
    %c0_15 = arith.constant 0 : index
    %26 = vector.load %arg2[%c4, %c0_14, %c0_15] : memref<5x32x128xf32, #tpu.memory_space<vmem>>, vector<1x32x128xf32>
    %27 = vector.shape_cast %26 : vector<1x32x128xf32> to vector<32x128xf32>
    %cst_16 = arith.constant dense<0.000000e+00> : vector<128x128xf32>
    %28 = tpu.matmul %25, %27, %cst_16 {dimension_numbers = #tpu.dot_dimension_numbers<[1], [0], [0], [1], [0, 0, 1, 1], [], []>} : vector<128x32xf32>, vector<32x128xf32>, vector<128x128xf32> -> vector<128x128xf32>
    %29 = arith.addf %23, %28 : vector<128x128xf32>
    %c0_17 = arith.constant 0 : index
    %c0_18 = arith.constant 0 : index
    %30 = vector.load %arg3[%c0_17, %c0_18] : memref<1x128xf32, #tpu.memory_space<vmem>>, vector<1x128xf32>
    %31 = vector.broadcast %30 : vector<1x128xf32> to vector<128x128xf32>
    %32 = arith.addf %29, %31 : vector<128x128xf32>
    %cst_19 = arith.constant 0.000000e+00 : f32
    %33 = vector.broadcast %cst_19 : f32 to vector<128x128xf32>
    %34 = arith.maximumf %32, %33 : vector<128x128xf32>
    %35 = vector.shape_cast %34 : vector<128x128xf32> to vector<8x16x128xf32>
    %c0_20 = arith.constant 0 : index
    %c0_21 = arith.constant 0 : index
    %36 = vector.load %arg4[%c0_20, %c0_21] : memref<16x128xf32, #tpu.memory_space<vmem>>, vector<16x128xf32>
    %37 = vector.shape_cast %36 : vector<16x128xf32> to vector<1x16x128xf32>
    %38 = vector.broadcast %37 : vector<1x16x128xf32> to vector<8x16x128xf32>
    %39 = arith.mulf %35, %38 : vector<8x16x128xf32>
    %cst_22 = arith.constant dense<0xFF800000> : vector<8x128xf32>
    %40 = vector.multi_reduction <maximumf>, %39, %cst_22 [1] : vector<8x16x128xf32> to vector<8x128xf32>
    %c0_23 = arith.constant 0 : index
    %c0_24 = arith.constant 0 : index
    %41 = vector.load %arg5[%c0_23, %c0_24] : memref<128x128xf32, #tpu.memory_space<vmem>>, vector<128x128xf32>
    %cst_25 = arith.constant dense<0.000000e+00> : vector<8x128xf32>
    %42 = tpu.matmul %40, %41, %cst_25 {dimension_numbers = #tpu.dot_dimension_numbers<[1], [0], [0], [1], [0, 0, 1, 1], [], []>} : vector<8x128xf32>, vector<128x128xf32>, vector<8x128xf32> -> vector<8x128xf32>
    %c0_26 = arith.constant 0 : index
    %c0_27 = arith.constant 0 : index
    %43 = vector.load %arg6[%c0_26, %c0_27] : memref<1x128xf32, #tpu.memory_space<vmem>>, vector<1x128xf32>
    %44 = vector.broadcast %43 : vector<1x128xf32> to vector<8x128xf32>
    %45 = arith.addf %42, %44 : vector<8x128xf32>
    %c0_28 = arith.constant 0 : index
    %c0_29 = arith.constant 0 : index
    %46 = vector.load %arg7[%c0_28, %c0_29] : memref<8x128xf32, #tpu.memory_space<vmem>>, vector<8x128xf32>
    tpu.vector_store %arg7[%c0_28, %c0_29], %45 {strides = array<i32>} : memref<8x128xf32, #tpu.memory_space<vmem>>, vector<8x128xf32>,
    return
  }
  func.func @transform_0(%arg0: i32) -> (i32, i32, i32) {
    %c0_i32 = arith.constant 0 : i32
    %c0_i32_0 = arith.constant 0 : i32
    %c0_i32_1 = arith.constant 0 : i32
    return %arg0, %c0_i32, %c0_i32_0 : i32, i32, i32
  }
  func.func @transform_1(%arg0: i32) -> (i32, i32, i32) {
    %c0_i32 = arith.constant 0 : i32
    %c0_i32_0 = arith.constant 0 : i32
    %c0_i32_1 = arith.constant 0 : i32
    %c0_i32_2 = arith.constant 0 : i32
    return %c0_i32, %c0_i32_0, %c0_i32_1 : i32, i32, i32
  }
  func.func @transform_2(%arg0: i32) -> (i32, i32) {
    %c0_i32 = arith.constant 0 : i32
    %c0_i32_0 = arith.constant 0 : i32
    %c0_i32_1 = arith.constant 0 : i32
    return %c0_i32, %c0_i32_0 : i32, i32
  }
  func.func @transform_3(%arg0: i32) -> (i32, i32) {
    %c0_i32 = arith.constant 0 : i32
    %c0_i32_0 = arith.constant 0 : i32
    %c0_i32_1 = arith.constant 0 : i32
    return %c0_i32, %c0_i32_0 : i32, i32
  }
  func.func @transform_4(%arg0: i32) -> (i32, i32) {
    %c0_i32 = arith.constant 0 : i32
    %c0_i32_0 = arith.constant 0 : i32
    %c0_i32_1 = arith.constant 0 : i32
    return %c0_i32, %c0_i32_0 : i32, i32
  }
  func.func @transform_5(%arg0: i32) -> (i32, i32) {
    %c0_i32 = arith.constant 0 : i32
    %c0_i32_0 = arith.constant 0 : i32
    %c0_i32_1 = arith.constant 0 : i32
    return %c0_i32, %c0_i32_0 : i32, i32
  }
  func.func @transform_6(%arg0: i32) -> (i32, i32) {
    %c0_i32 = arith.constant 0 : i32
    %c0_i32_0 = arith.constant 0 : i32
    return %arg0, %c0_i32 : i32, i32
  }
}

</mosaic_0001>

<llo_original>
// kernel: tpu_custom_call.1
$region0: #{tpu_custom_call.1}
  #allocation0 [shape = 'u32[]', space=smem, size = 0x4, offset = 0x4, fixed_abs, tag = 'smem constant byte address 0x4 - core index']
  #allocation1 [shape = 'u32[144,128]{1,0:T(1,128)}', space=vmem, size = 0x12000, scoped, tag = 'internal scratch']
  %s0 = inlined_call_operand.vmem [shape: f32[8,20,32], index: 0, kind: input, shape index: {}]
  %s1 = inlined_call_operand.vmem [shape: f32[5,32,128], index: 1, kind: input, shape index: {}]
  %s2 = inlined_call_operand.vmem [shape: f32[1,128], index: 2, kind: input, shape index: {}]
  %s3 = inlined_call_operand.vmem [shape: f32[16,128], index: 3, kind: input, shape index: {}]
  %s4 = inlined_call_operand.vmem [shape: f32[128,128], index: 4, kind: input, shape index: {}]
  %s5 = inlined_call_operand.vmem [shape: f32[1,128], index: 5, kind: input, shape index: {}]
  %s6 = inlined_call_operand.hbm [shape: f32[8,128], index: 6, kind: output, shape index: {}]
  %s7 = sld [smem:[#allocation0]]
  $region34: #{tpu_custom_call.1} parent=0
    _
  %s9 = ssub.s32 1, %s7
  %s10 = scalar_select 0, %s9, %s7
  $region1: #{tpu_custom_call.1} parent=0
    #allocation2 [shape = 'u8[4096]{0}', space=vmem, size = 0x1000, scoped, tag = 'output window, operand 0, single buffered']
    #allocation3 [shape = 's32[1]{0}', space=sflag, size = 0x4, scoped, tag = 'scoped memory for tpu_custom_call.1']
    %11 = vsyncpa [#allocation3], 0
    // Predicated region
    $region2: #{tpu_custom_call.1} parent=1 // pred_check
      _
    $region3: #{tpu_custom_call.1} parent=1 // pred_check_branch
      %13 = sbr.rel (0) target = $region5
    $region4: #{tpu_custom_call.1} parent=1 // pred_region
      _
    $region5: #{tpu_custom_call.1} parent=1 // pred_fallthru
      _
    // Predicated region
    $region6: #{tpu_custom_call.1} parent=1 // pred_check
      _
    $region7: #{tpu_custom_call.1} parent=1 // pred_check_branch
      %15 = sbr.rel (0) target = $region9
    $region8: #{tpu_custom_call.1} parent=1 // pred_region
      _
    $region9: #{tpu_custom_call.1} parent=1 // pred_fallthru
      _
    // Predicated region
    $region10: #{tpu_custom_call.1} parent=1 // pred_check
      _
    $region11: #{tpu_custom_call.1} parent=1 // pred_check_branch
      %17 = sbr.rel (0) target = $region13
    $region12: #{tpu_custom_call.1} parent=1 // pred_region
      _
    $region13: #{tpu_custom_call.1} parent=1 // pred_fallthru
      _
    // Predicated region
    $region14: #{tpu_custom_call.1} parent=1 // pred_check
      _
    $region15: #{tpu_custom_call.1} parent=1 // pred_check_branch
      %19 = sbr.rel (0) target = $region17
    $region16: #{tpu_custom_call.1} parent=1 // pred_region
      _
    $region17: #{tpu_custom_call.1} parent=1 // pred_fallthru
      _
    // Predicated region
    $region18: #{tpu_custom_call.1} parent=1 // pred_check
      _
    $region19: #{tpu_custom_call.1} parent=1 // pred_check_branch
      %21 = sbr.rel (0) target = $region21
    $region20: #{tpu_custom_call.1} parent=1 // pred_region
      _
    $region21: #{tpu_custom_call.1} parent=1 // pred_fallthru
      _
    // Predicated region
    $region22: #{tpu_custom_call.1} parent=1 // pred_check
      _
    $region23: #{tpu_custom_call.1} parent=1 // pred_check_branch
      %23 = sbr.rel (0) target = $region25
    $region24: #{tpu_custom_call.1} parent=1 // pred_region
      _
    $region25: #{tpu_custom_call.1} parent=1 // pred_fallthru
      _
    %v24 = vld [vmem:[%s0] sm:$0xff]
    %v25 = vld [vmem:[%s0 + $0x8] sm:$0xff]
    %v26 = vld [vmem:[%s0 + $0x10] sm:$0xf]
    %v27 = vld [vmem:[%s0 + $0x18] sm:$0xff]
    %v28 = vld [vmem:[%s0 + $0x20] sm:$0xff]
    %v29 = vld [vmem:[%s0 + $0x28] sm:$0xf]
    %v30 = vld [vmem:[%s0 + $0x30] sm:$0xff]
    %v31 = vld [vmem:[%s0 + $0x38] sm:$0xff]
    %v32 = vld [vmem:[%s0 + $0x40] sm:$0xf]
    %v33 = vld [vmem:[%s0 + $0x48] sm:$0xff]
    %v34 = vld [vmem:[%s0 + $0x50] sm:$0xff]
    %v35 = vld [vmem:[%s0 + $0x58] sm:$0xf]
    %v36 = vld [vmem:[%s0 + $0x60] sm:$0xff]
    %v37 = vld [vmem:[%s0 + $0x68] sm:$0xff]
    %v38 = vld [vmem:[%s0 + $0x70] sm:$0xf]
    %v39 = vld [vmem:[%s0 + $0x78] sm:$0xff]
    %v40 = vld [vmem:[%s0 + $0x80] sm:$0xff]
    %v41 = vld [vmem:[%s0 + $0x88] sm:$0xf]
    %v42 = vld [vmem:[%s0 + $0x90] sm:$0xff]
    %v43 = vld [vmem:[%s0 + $0x98] sm:$0xff]
    %v44 = vld [vmem:[%s0 + $0xa0] sm:$0xf]
    %v45 = vld [vmem:[%s0 + $0xa8] sm:$0xff]
    %v46 = vld [vmem:[%s0 + $0xb0] sm:$0xff]
    %v47 = vld [vmem:[%s0 + $0xb8] sm:$0xf]
    %v48 = vld [vmem:[%s1] sm:$0xff]
    %v49 = vld [vmem:[%s1 + $0x8] sm:$0xff]
    %v50 = vld [vmem:[%s1 + $0x10] sm:$0xff]
    %v51 = vld [vmem:[%s1 + $0x18] sm:$0xff]
    %vm76 = vcmask 1046528
    %v77 = vrot.slane %v24, 1
    %v78 = vrot.slane %v25, 1
    %v79 = vsel %vm76, %v77, %v78
    %v80 = vrot.slane %v26, 1
    %v81 = vsel %vm76, %v78, %v80
    %v82 = vrot.slane %v27, 1
    %v83 = vrot.slane %v28, 1
    %v84 = vsel %vm76, %v82, %v83
    %v85 = vrot.slane %v29, 1
    %v86 = vsel %vm76, %v83, %v85
    %v87 = vrot.slane %v30, 1
    %v88 = vrot.slane %v31, 1
    %v89 = vsel %vm76, %v87, %v88
    %v90 = vrot.slane %v32, 1
    %v91 = vsel %vm76, %v88, %v90
    %v92 = vrot.slane %v33, 1
    %v93 = vrot.slane %v34, 1
    %v94 = vsel %vm76, %v92, %v93
    %v95 = vrot.slane %v35, 1
    %v96 = vsel %vm76, %v93, %v95
    %v97 = vrot.slane %v36, 1
    %v98 = vrot.slane %v37, 1
    %v99 = vsel %vm76, %v97, %v98
    %v100 = vrot.slane %v38, 1
    %v101 = vsel %vm76, %v98, %v100
    %v102 = vrot.slane %v39, 1
    %v103 = vrot.slane %v40, 1
    %v104 = vsel %vm76, %v102, %v103
    %v105 = vrot.slane %v41, 1
    %v106 = vsel %vm76, %v103, %v105
    %v107 = vrot.slane %v42, 1
    %v108 = vrot.slane %v43, 1
    %v109 = vsel %vm76, %v107, %v108
    %v110 = vrot.slane %v44, 1
    %v111 = vsel %vm76, %v108, %v110
    %v112 = vrot.slane %v45, 1
    %v113 = vrot.slane %v46, 1
    %v114 = vsel %vm76, %v112, %v113
    %v115 = vrot.slane %v47, 1
    %v116 = vsel %vm76, %v113, %v115
    %s117 = scalar_lea.vmem %s1, 32
    %v118 = vld [vmem:[%s117] sm:$0xff]
    %v119 = vld [vmem:[%s117 + $0x8] sm:$0xff]
    %v120 = vld [vmem:[%s117 + $0x10] sm:$0xff]
    %v121 = vld [vmem:[%s117 + $0x18] sm:$0xff]
    %vm122 = vcmask 261120
    %v123 = vsel %vm122, %v79, 0
    %v125 = vsel %vm122, %v81, 0
    %v127 = vsel %vm122, %v84, 0
    %v129 = vsel %vm122, %v86, 0
    %v131 = vsel %vm122, %v89, 0
    %v133 = vsel %vm122, %v91, 0
    %v135 = vsel %vm122, %v94, 0
    %v137 = vsel %vm122, %v96, 0
    %v139 = vsel %vm122, %v99, 0
    %v141 = vsel %vm122, %v101, 0
    %v143 = vsel %vm122, %v104, 0
    %v145 = vsel %vm122, %v106, 0
    %v147 = vsel %vm122, %v109, 0
    %v149 = vsel %vm122, %v111, 0
    %v151 = vsel %vm122, %v114, 0
    %v153 = vsel %vm122, %v116, 0
    %155 = vmatprep.subr.mxu0 0.0
    %156 = vmatpush1.msra.mxu0 0.0
    %157 = vmatprep.subr.mxu0 0.0
    %158 = vmatpush1.msra.mxu0 0.0
    %159 = vmatprep.subr.mxu0 0.0
    %160 = vmatpush1.msra.mxu0 0.0
    %161 = vmatprep.subr.mxu0 0.0
    %162 = vmatpush1.msra.mxu0 0.0
    %163 = vmatprep.subr.mxu0 0.0
    %164 = vmatpush1.msra.mxu0 0.0
    %165 = vmatprep.subr.mxu0 0.0
    %166 = vmatpush1.msra.mxu0 0.0
    %167 = vmatprep.subr.mxu0 0.0
    %168 = vmatpush1.msra.mxu0 0.0
    %169 = vmatprep.subr.mxu0 0.0
    %170 = vmatpush1.msra.mxu0 0.0
    %171 = vmatprep.subr.mxu0 0.0
    %172 = vmatpush1.msra.mxu0 0.0
    %173 = vmatprep.subr.mxu0 0.0
    %174 = vmatpush1.msra.mxu0 0.0
    %175 = vmatprep.subr.mxu0 0.0
    %176 = vmatpush1.msra.mxu0 0.0
    %177 = vmatprep.subr.mxu0 0.0
    %178 = vmatpush1.msra.mxu0 0.0
    %179 = vmatprep.subr.mxu0 0.0
    %180 = vmatpush1.msra.mxu0 %v121
    %181 = vmatprep.subr.mxu0 0.0
    %182 = vmatpush1.msra.mxu0 %v120
    %183 = vmatprep.subr.mxu0 0.0
    %184 = vmatpush1.msra.mxu0 %v119
    %185 = vmatprep.subr.mxu0 0.0
    %186 = vmatpush1.msra.mxu0 %v118
    %187 = vmatprep.subr.mxu0 0.0
    %188 = vmatpush2.msra.mxu0 0.0
    %189 = vmatprep.subr.mxu0 0.0
    %190 = vmatpush2.msra.mxu0 0.0
    %191 = vmatprep.subr.mxu0 0.0
    %192 = vmatpush2.msra.mxu0 0.0
    %193 = vmatprep.subr.mxu0 0.0
    %194 = vmatpush2.msra.mxu0 0.0
    %195 = vmatprep.subr.mxu0 0.0
    %196 = vmatpush2.msra.mxu0 0.0
    %197 = vmatprep.subr.mxu0 0.0
    %198 = vmatpush2.msra.mxu0 0.0
    %199 = vmatprep.subr.mxu0 0.0
    %200 = vmatpush2.msra.mxu0 0.0
    %201 = vmatprep.subr.mxu0 0.0
    %202 = vmatpush2.msra.mxu0 0.0
    %203 = vmatprep.subr.mxu0 0.0
    %204 = vmatpush2.msra.mxu0 0.0
    %205 = vmatprep.subr.mxu0 0.0
    %206 = vmatpush2.msra.mxu0 0.0
    %207 = vmatprep.subr.mxu0 0.0
    %208 = vmatpush2.msra.mxu0 0.0
    %209 = vmatprep.subr.mxu0 0.0
    %210 = vmatpush2.msra.mxu0 0.0
    %211 = vmatprep.subr.mxu0 0.0
    %212 = vmatpush2.msra.mxu0 0.0
    %213 = vmatprep.subr.mxu0 0.0
    %214 = vmatpush2.msra.mxu0 0.0
    %215 = vmatprep.subr.mxu0 0.0
    %216 = vmatpush2.msra.mxu0 0.0
    %217 = vmatprep.subr.mxu0 0.0
    %218 = vmatpush2.msra.mxu0 0.0
    %219 = vmatprep.mubr.f32.mxu0 0.0
    %220 = vmatmul.mubr.f32.gmra.mxu0 %v123
    %v221 = vpop.f32.mrf.mxu0
    %v222 = vadd.f32 0.0, %v221
    %v223 = vpop.f32.mrf.mxu0
    %224 = vmatprep.mubr.f32.mxu0 0.0
    %225 = vmatmul.mubr.f32.gmra.mxu0 %v125
    %v226 = vpop.f32.mrf.mxu0
    %v227 = vadd.f32 0.0, %v226
    %v228 = vpop.f32.mrf.mxu0
    %229 = vmatprep.mubr.f32.mxu0 0.0
    %230 = vmatmul.mubr.f32.gmra.mxu0 %v127
    %v231 = vpop.f32.mrf.mxu0
    %v232 = vadd.f32 0.0, %v231
    %v233 = vpop.f32.mrf.mxu0
    %234 = vmatprep.mubr.f32.mxu0 0.0
    %235 = vmatmul.mubr.f32.gmra.mxu0 %v129
    %v236 = vpop.f32.mrf.mxu0
    %v237 = vadd.f32 0.0, %v236
    %v238 = vpop.f32.mrf.mxu0
    %239 = vmatprep.mubr.f32.mxu0 0.0
    %240 = vmatmul.mubr.f32.gmra.mxu0 %v131
    %v241 = vpop.f32.mrf.mxu0
    %v242 = vadd.f32 0.0, %v241
    %v243 = vpop.f32.mrf.mxu0
    %244 = vmatprep.mubr.f32.mxu0 0.0
    %245 = vmatmul.mubr.f32.gmra.mxu0 %v133
    %v246 = vpop.f32.mrf.mxu0
    %v247 = vadd.f32 0.0, %v246
    %v248 = vpop.f32.mrf.mxu0
    %249 = vmatprep.mubr.f32.mxu0 0.0
    %250 = vmatmul.mubr.f32.gmra.mxu0 %v135
    %v251 = vpop.f32.mrf.mxu0
    %v252 = vadd.f32 0.0, %v251
    %v253 = vpop.f32.mrf.mxu0
    %254 = vmatprep.mubr.f32.mxu0 0.0
    %255 = vmatmul.mubr.f32.gmra.mxu0 %v137
    %v256 = vpop.f32.mrf.mxu0
    %v257 = vadd.f32 0.0, %v256
    %v258 = vpop.f32.mrf.mxu0
    %259 = vmatprep.mubr.f32.mxu0 0.0
    %260 = vmatmul.mubr.f32.gmra.mxu0 %v139
    %v261 = vpop.f32.mrf.mxu0
    %v262 = vadd.f32 0.0, %v261
    %v263 = vpop.f32.mrf.mxu0
    %264 = vmatprep.mubr.f32.mxu0 0.0
    %265 = vmatmul.mubr.f32.gmra.mxu0 %v141
    %v266 = vpop.f32.mrf.mxu0
    %v267 = vadd.f32 0.0, %v266
    %v268 = vpop.f32.mrf.mxu0
    %269 = vmatprep.mubr.f32.mxu0 0.0
    %270 = vmatmul.mubr.f32.gmra.mxu0 %v143
    %v271 = vpop.f32.mrf.mxu0
    %v272 = vadd.f32 0.0, %v271
    %v273 = vpop.f32.mrf.mxu0
    %274 = vmatprep.mubr.f32.mxu0 0.0
    %275 = vmatmul.mubr.f32.gmra.mxu0 %v145
    %v276 = vpop.f32.mrf.mxu0
    %v277 = vadd.f32 0.0, %v276
    %v278 = vpop.f32.mrf.mxu0
    %279 = vmatprep.mubr.f32.mxu0 0.0
    %280 = vmatmul.mubr.f32.gmra.mxu0 %v147
    %v281 = vpop.f32.mrf.mxu0
    %v282 = vadd.f32 0.0, %v281
    %v283 = vpop.f32.mrf.mxu0
    %284 = vmatprep.mubr.f32.mxu0 0.0
    %285 = vmatmul.mubr.f32.gmra.mxu0 %v149
    %v286 = vpop.f32.mrf.mxu0
    %v287 = vadd.f32 0.0, %v286
    %v288 = vpop.f32.mrf.mxu0
    %289 = vmatprep.mubr.f32.mxu0 0.0
    %290 = vmatmul.mubr.f32.gmra.mxu0 %v151
    %v291 = vpop.f32.mrf.mxu0
    %v292 = vadd.f32 0.0, %v291
    %v293 = vpop.f32.mrf.mxu0
    %294 = vmatprep.mubr.f32.mxu0 0.0
    %295 = vmatmul.mubr.f32.gmra.mxu0 %v153
    %v296 = vpop.f32.mrf.mxu0
    %v297 = vadd.f32 0.0, %v296
    %v298 = vpop.f32.mrf.mxu0
    %299 = vdwg.mxu0
    %v300 = vsel %vm122, %v24, 0
    %v302 = vsel %vm122, %v25, 0
    %v304 = vsel %vm122, %v27, 0
    %v306 = vsel %vm122, %v28, 0
    %v308 = vsel %vm122, %v30, 0
    %v310 = vsel %vm122, %v31, 0
    %v312 = vsel %vm122, %v33, 0
    %v314 = vsel %vm122, %v34, 0
    %v316 = vsel %vm122, %v36, 0
    %v318 = vsel %vm122, %v37, 0
    %v320 = vsel %vm122, %v39, 0
    %v322 = vsel %vm122, %v40, 0
    %v324 = vsel %vm122, %v42, 0
    %v326 = vsel %vm122, %v43, 0
    %v328 = vsel %vm122, %v45, 0
    %v330 = vsel %vm122, %v46, 0
    %332 = vmatprep.subr.mxu0 0.0
    %333 = vmatpush1.msra.mxu0 0.0
    %334 = vmatprep.subr.mxu0 0.0
    %335 = vmatpush1.msra.mxu0 0.0
    %336 = vmatprep.subr.mxu0 0.0
    %337 = vmatpush1.msra.mxu0 0.0
    %338 = vmatprep.subr.mxu0 0.0
    %339 = vmatpush1.msra.mxu0 0.0
    %340 = vmatprep.subr.mxu0 0.0
    %341 = vmatpush1.msra.mxu0 0.0
    %342 = vmatprep.subr.mxu0 0.0
    %343 = vmatpush1.msra.mxu0 0.0
    %344 = vmatprep.subr.mxu0 0.0
    %345 = vmatpush1.msra.mxu0 0.0
    %346 = vmatprep.subr.mxu0 0.0
    %347 = vmatpush1.msra.mxu0 0.0
    %348 = vmatprep.subr.mxu0 0.0
    %349 = vmatpush1.msra.mxu0 0.0
    %350 = vmatprep.subr.mxu0 0.0
    %351 = vmatpush1.msra.mxu0 0.0
    %352 = vmatprep.subr.mxu0 0.0
    %353 = vmatpush1.msra.mxu0 0.0
    %354 = vmatprep.subr.mxu0 0.0
    %355 = vmatpush1.msra.mxu0 0.0
    %356 = vmatprep.subr.mxu0 0.0
    %357 = vmatpush1.msra.mxu0 %v51
    %358 = vmatprep.subr.mxu0 0.0
    %359 = vmatpush1.msra.mxu0 %v50
    %360 = vmatprep.subr.mxu0 0.0
    %361 = vmatpush1.msra.mxu0 %v49
    %362 = vmatprep.subr.mxu0 0.0
    %363 = vmatpush1.msra.mxu0 %v48
    %364 = vmatprep.subr.mxu0 0.0
    %365 = vmatpush2.msra.mxu0 0.0
    %366 = vmatprep.subr.mxu0 0.0
    %367 = vmatpush2.msra.mxu0 0.0
    %368 = vmatprep.subr.mxu0 0.0
    %369 = vmatpush2.msra.mxu0 0.0
    %370 = vmatprep.subr.mxu0 0.0
    %371 = vmatpush2.msra.mxu0 0.0
    %372 = vmatprep.subr.mxu0 0.0
    %373 = vmatpush2.msra.mxu0 0.0
    %374 = vmatprep.subr.mxu0 0.0
    %375 = vmatpush2.msra.mxu0 0.0
    %376 = vmatprep.subr.mxu0 0.0
    %377 = vmatpush2.msra.mxu0 0.0
    %378 = vmatprep.subr.mxu0 0.0
    %379 = vmatpush2.msra.mxu0 0.0
    %380 = vmatprep.subr.mxu0 0.0
    %381 = vmatpush2.msra.mxu0 0.0
    %382 = vmatprep.subr.mxu0 0.0
    %383 = vmatpush2.msra.mxu0 0.0
    %384 = vmatprep.subr.mxu0 0.0
    %385 = vmatpush2.msra.mxu0 0.0
    %386 = vmatprep.subr.mxu0 0.0
    %387 = vmatpush2.msra.mxu0 0.0
    %388 = vmatprep.subr.mxu0 0.0
    %389 = vmatpush2.msra.mxu0 0.0
    %390 = vmatprep.subr.mxu0 0.0
    %391 = vmatpush2.msra.mxu0 0.0
    %392 = vmatprep.subr.mxu0 0.0
    %393 = vmatpush2.msra.mxu0 0.0
    %394 = vmatprep.subr.mxu0 0.0
    %395 = vmatpush2.msra.mxu0 0.0
    %396 = vmatprep.mubr.f32.mxu0 0.0
    %397 = vmatmul.mubr.f32.gmra.mxu0 %v300
    %v398 = vpop.f32.mrf.mxu0
    %v399 = vadd.f32 %v222, %v398
    %v400 = vpop.f32.mrf.mxu0
    %401 = vmatprep.mubr.f32.mxu0 0.0
    %402 = vmatmul.mubr.f32.gmra.mxu0 %v302
    %v403 = vpop.f32.mrf.mxu0
    %v404 = vadd.f32 %v227, %v403
    %v405 = vpop.f32.mrf.mxu0
    %406 = vmatprep.mubr.f32.mxu0 0.0
    %407 = vmatmul.mubr.f32.gmra.mxu0 %v304
    %v408 = vpop.f32.mrf.mxu0
    %v409 = vadd.f32 %v232, %v408
    %v410 = vpop.f32.mrf.mxu0
    %411 = vmatprep.mubr.f32.mxu0 0.0
    %412 = vmatmul.mubr.f32.gmra.mxu0 %v306
    %v413 = vpop.f32.mrf.mxu0
    %v414 = vadd.f32 %v237, %v413
    %v415 = vpop.f32.mrf.mxu0
    %416 = vmatprep.mubr.f32.mxu0 0.0
    %417 = vmatmul.mubr.f32.gmra.mxu0 %v308
    %v418 = vpop.f32.mrf.mxu0
    %v419 = vadd.f32 %v242, %v418
    %v420 = vpop.f32.mrf.mxu0
    %421 = vmatprep.mubr.f32.mxu0 0.0
    %422 = vmatmul.mubr.f32.gmra.mxu0 %v310
    %v423 = vpop.f32.mrf.mxu0
    %v424 = vadd.f32 %v247, %v423
    %v425 = vpop.f32.mrf.mxu0
    %426 = vmatprep.mubr.f32.mxu0 0.0
    %427 = vmatmul.mubr.f32.gmra.mxu0 %v312
    %v428 = vpop.f32.mrf.mxu0
    %v429 = vadd.f32 %v252, %v428
    %v430 = vpop.f32.mrf.mxu0
    %431 = vmatprep.mubr.f32.mxu0 0.0
    %432 = vmatmul.mubr.f32.gmra.mxu0 %v314
    %v433 = vpop.f32.mrf.mxu0
    %v434 = vadd.f32 %v257, %v433
    %v435 = vpop.f32.mrf.mxu0
    %436 = vmatprep.mubr.f32.mxu0 0.0
    %437 = vmatmul.mubr.f32.gmra.mxu0 %v316
    %v438 = vpop.f32.mrf.mxu0
    %v439 = vadd.f32 %v262, %v438
    %v440 = vpop.f32.mrf.mxu0
    %441 = vmatprep.mubr.f32.mxu0 0.0
    %442 = vmatmul.mubr.f32.gmra.mxu0 %v318
    %v443 = vpop.f32.mrf.mxu0
    %v444 = vadd.f32 %v267, %v443
    %v445 = vpop.f32.mrf.mxu0
    %446 = vmatprep.mubr.f32.mxu0 0.0
    %447 = vmatmul.mubr.f32.gmra.mxu0 %v320
    %v448 = vpop.f32.mrf.mxu0
    %v449 = vadd.f32 %v272, %v448
    %v450 = vpop.f32.mrf.mxu0
    %451 = vmatprep.mubr.f32.mxu0 0.0
    %452 = vmatmul.mubr.f32.gmra.mxu0 %v322
    %v453 = vpop.f32.mrf.mxu0
    %v454 = vadd.f32 %v277, %v453
    %v455 = vpop.f32.mrf.mxu0
    %456 = vmatprep.mubr.f32.mxu0 0.0
    %457 = vmatmul.mubr.f32.gmra.mxu0 %v324
    %v458 = vpop.f32.mrf.mxu0
    %v459 = vadd.f32 %v282, %v458
    %v460 = vpop.f32.mrf.mxu0
    %461 = vmatprep.mubr.f32.mxu0 0.0
    %462 = vmatmul.mubr.f32.gmra.mxu0 %v326
    %v463 = vpop.f32.mrf.mxu0
    %v464 = vadd.f32 %v287, %v463
    %v465 = vpop.f32.mrf.mxu0
    %466 = vmatprep.mubr.f32.mxu0 0.0
    %467 = vmatmul.mubr.f32.gmra.mxu0 %v328
    %v468 = vpop.f32.mrf.mxu0
    %v469 = vadd.f32 %v292, %v468
    %v470 = vpop.f32.mrf.mxu0
    %471 = vmatprep.mubr.f32.mxu0 0.0
    %472 = vmatmul.mubr.f32.gmra.mxu0 %v330
    %v473 = vpop.f32.mrf.mxu0
    %v474 = vadd.f32 %v297, %v473
    %v475 = vpop.f32.mrf.mxu0
    %476 = vdwg.mxu0
    %vm477 = vcmask 1045504
    %v478 = vrot.slane %v24, 2
    %v479 = vrot.slane %v25, 2
    %v480 = vsel %vm477, %v478, %v479
    %v481 = vrot.slane %v26, 2
    %v482 = vsel %vm477, %v479, %v481
    %v483 = vrot.slane %v27, 2
    %v484 = vrot.slane %v28, 2
    %v485 = vsel %vm477, %v483, %v484
    %v486 = vrot.slane %v29, 2
    %v487 = vsel %vm477, %v484, %v486
    %v488 = vrot.slane %v30, 2
    %v489 = vrot.slane %v31, 2
    %v490 = vsel %vm477, %v488, %v489
    %v491 = vrot.slane %v32, 2
    %v492 = vsel %vm477, %v489, %v491
    %v493 = vrot.slane %v33, 2
    %v494 = vrot.slane %v34, 2
    %v495 = vsel %vm477, %v493, %v494
    %v496 = vrot.slane %v35, 2
    %v497 = vsel %vm477, %v494, %v496
    %v498 = vrot.slane %v36, 2
    %v499 = vrot.slane %v37, 2
    %v500 = vsel %vm477, %v498, %v499
    %v501 = vrot.slane %v38, 2
    %v502 = vsel %vm477, %v499, %v501
    %v503 = vrot.slane %v39, 2
    %v504 = vrot.slane %v40, 2
    %v505 = vsel %vm477, %v503, %v504
    %v506 = vrot.slane %v41, 2
    %v507 = vsel %vm477, %v504, %v506
    %v508 = vrot.slane %v42, 2
    %v509 = vrot.slane %v43, 2
    %v510 = vsel %vm477, %v508, %v509
    %v511 = vrot.slane %v44, 2
    %v512 = vsel %vm477, %v509, %v511
    %v513 = vrot.slane %v45, 2
    %v514 = vrot.slane %v46, 2
    %v515 = vsel %vm477, %v513, %v514
    %v516 = vrot.slane %v47, 2
    %v517 = vsel %vm477, %v514, %v516
    %s518 = scalar_lea.vmem %s1, 64
    %v519 = vld [vmem:[%s518] sm:$0xff]
    %v520 = vld [vmem:[%s518 + $0x8] sm:$0xff]
    %v521 = vld [vmem:[%s518 + $0x10] sm:$0xff]
    %v522 = vld [vmem:[%s518 + $0x18] sm:$0xff]
    %v523 = vsel %vm122, %v480, 0
    %v525 = vsel %vm122, %v482, 0
    %v527 = vsel %vm122, %v485, 0
    %v529 = vsel %vm122, %v487, 0
    %v531 = vsel %vm122, %v490, 0
    %v533 = vsel %vm122, %v492, 0
    %v535 = vsel %vm122, %v495, 0
    %v537 = vsel %vm122, %v497, 0
    %v539 = vsel %vm122, %v500, 0
    %v541 = vsel %vm122, %v502, 0
    %v543 = vsel %vm122, %v505, 0
    %v545 = vsel %vm122, %v507, 0
    %v547 = vsel %vm122, %v510, 0
    %v549 = vsel %vm122, %v512, 0
    %v551 = vsel %vm122, %v515, 0
    %v553 = vsel %vm122, %v517, 0
    %555 = vmatprep.subr.mxu0 0.0
    %556 = vmatpush1.msra.mxu0 0.0
    %557 = vmatprep.subr.mxu0 0.0
    %558 = vmatpush1.msra.mxu0 0.0
    %559 = vmatprep.subr.mxu0 0.0
    %560 = vmatpush1.msra.mxu0 0.0
    %561 = vmatprep.subr.mxu0 0.0
    %562 = vmatpush1.msra.mxu0 0.0
    %563 = vmatprep.subr.mxu0 0.0
    %564 = vmatpush1.msra.mxu0 0.0
    %565 = vmatprep.subr.mxu0 0.0
    %566 = vmatpush1.msra.mxu0 0.0
    %567 = vmatprep.subr.mxu0 0.0
    %568 = vmatpush1.msra.mxu0 0.0
    %569 = vmatprep.subr.mxu0 0.0
    %570 = vmatpush1.msra.mxu0 0.0
    %571 = vmatprep.subr.mxu0 0.0
    %572 = vmatpush1.msra.mxu0 0.0
    %573 = vmatprep.subr.mxu0 0.0
    %574 = vmatpush1.msra.mxu0 0.0
    %575 = vmatprep.subr.mxu0 0.0
    %576 = vmatpush1.msra.mxu0 0.0
    %577 = vmatprep.subr.mxu0 0.0
    %578 = vmatpush1.msra.mxu0 0.0
    %579 = vmatprep.subr.mxu0 0.0
    %580 = vmatpush1.msra.mxu0 %v522
    %581 = vmatprep.subr.mxu0 0.0
    %582 = vmatpush1.msra.mxu0 %v521
    %583 = vmatprep.subr.mxu0 0.0
    %584 = vmatpush1.msra.mxu0 %v520
    %585 = vmatprep.subr.mxu0 0.0
    %586 = vmatpush1.msra.mxu0 %v519
    %587 = vmatprep.subr.mxu0 0.0
    %588 = vmatpush2.msra.mxu0 0.0
    %589 = vmatprep.subr.mxu0 0.0
    %590 = vmatpush2.msra.mxu0 0.0
    %591 = vmatprep.subr.mxu0 0.0
    %592 = vmatpush2.msra.mxu0 0.0
    %593 = vmatprep.subr.mxu0 0.0
    %594 = vmatpush2.msra.mxu0 0.0
    %595 = vmatprep.subr.mxu0 0.0
    %596 = vmatpush2.msra.mxu0 0.0
    %597 = vmatprep.subr.mxu0 0.0
    %598 = vmatpush2.msra.mxu0 0.0
    %599 = vmatprep.subr.mxu0 0.0
    %600 = vmatpush2.msra.mxu0 0.0
    %601 = vmatprep.subr.mxu0 0.0
    %602 = vmatpush2.msra.mxu0 0.0
    %603 = vmatprep.subr.mxu0 0.0
    %604 = vmatpush2.msra.mxu0 0.0
    %605 = vmatprep.subr.mxu0 0.0
    %606 = vmatpush2.msra.mxu0 0.0
    %607 = vmatprep.subr.mxu0 0.0
    %608 = vmatpush2.msra.mxu0 0.0
    %609 = vmatprep.subr.mxu0 0.0
    %610 = vmatpush2.msra.mxu0 0.0
    %611 = vmatprep.subr.mxu0 0.0
    %612 = vmatpush2.msra.mxu0 0.0
    %613 = vmatprep.subr.mxu0 0.0
    %614 = vmatpush2.msra.mxu0 0.0
    %615 = vmatprep.subr.mxu0 0.0
    %616 = vmatpush2.msra.mxu0 0.0
    %617 = vmatprep.subr.mxu0 0.0
    %618 = vmatpush2.msra.mxu0 0.0
    %619 = vmatprep.mubr.f32.mxu0 0.0
    %620 = vmatmul.mubr.f32.gmra.mxu0 %v523
    %v621 = vpop.f32.mrf.mxu0
    %v622 = vadd.f32 0.0, %v621
    %v623 = vpop.f32.mrf.mxu0
    %624 = vmatprep.mubr.f32.mxu0 0.0
    %625 = vmatmul.mubr.f32.gmra.mxu0 %v525
    %v626 = vpop.f32.mrf.mxu0
    %v627 = vadd.f32 0.0, %v626
    %v628 = vpop.f32.mrf.mxu0
    %629 = vmatprep.mubr.f32.mxu0 0.0
    %630 = vmatmul.mubr.f32.gmra.mxu0 %v527
    %v631 = vpop.f32.mrf.mxu0
    %v632 = vadd.f32 0.0, %v631
    %v633 = vpop.f32.mrf.mxu0
    %634 = vmatprep.mubr.f32.mxu0 0.0
    %635 = vmatmul.mubr.f32.gmra.mxu0 %v529
    %v636 = vpop.f32.mrf.mxu0
    %v637 = vadd.f32 0.0, %v636
    %v638 = vpop.f32.mrf.mxu0
    %639 = vmatprep.mubr.f32.mxu0 0.0
    %640 = vmatmul.mubr.f32.gmra.mxu0 %v531
    %v641 = vpop.f32.mrf.mxu0
    %v642 = vadd.f32 0.0, %v641
    %v643 = vpop.f32.mrf.mxu0
    %644 = vmatprep.mubr.f32.mxu0 0.0
    %645 = vmatmul.mubr.f32.gmra.mxu0 %v533
    %v646 = vpop.f32.mrf.mxu0
    %v647 = vadd.f32 0.0, %v646
    %v648 = vpop.f32.mrf.mxu0
    %649 = vmatprep.mubr.f32.mxu0 0.0
    %650 = vmatmul.mubr.f32.gmra.mxu0 %v535
    %v651 = vpop.f32.mrf.mxu0
    %v652 = vadd.f32 0.0, %v651
    %v653 = vpop.f32.mrf.mxu0
    %654 = vmatprep.mubr.f32.mxu0 0.0
    %655 = vmatmul.mubr.f32.gmra.mxu0 %v537
    %v656 = vpop.f32.mrf.mxu0
    %v657 = vadd.f32 0.0, %v656
    %v658 = vpop.f32.mrf.mxu0
    %659 = vmatprep.mubr.f32.mxu0 0.0
    %660 = vmatmul.mubr.f32.gmra.mxu0 %v539
    %v661 = vpop.f32.mrf.mxu0
    %v662 = vadd.f32 0.0, %v661
    %v663 = vpop.f32.mrf.mxu0
    %664 = vmatprep.mubr.f32.mxu0 0.0
    %665 = vmatmul.mubr.f32.gmra.mxu0 %v541
    %v666 = vpop.f32.mrf.mxu0
    %v667 = vadd.f32 0.0, %v666
    %v668 = vpop.f32.mrf.mxu0
    %669 = vmatprep.mubr.f32.mxu0 0.0
    %670 = vmatmul.mubr.f32.gmra.mxu0 %v543
    %v671 = vpop.f32.mrf.mxu0
    %v672 = vadd.f32 0.0, %v671
    %v673 = vpop.f32.mrf.mxu0
    %674 = vmatprep.mubr.f32.mxu0 0.0
    %675 = vmatmul.mubr.f32.gmra.mxu0 %v545
    %v676 = vpop.f32.mrf.mxu0
    %v677 = vadd.f32 0.0, %v676
    %v678 = vpop.f32.mrf.mxu0
    %679 = vmatprep.mubr.f32.mxu0 0.0
    %680 = vmatmul.mubr.f32.gmra.mxu0 %v547
    %v681 = vpop.f32.mrf.mxu0
    %v682 = vadd.f32 0.0, %v681
    %v683 = vpop.f32.mrf.mxu0
    %684 = vmatprep.mubr.f32.mxu0 0.0
    %685 = vmatmul.mubr.f32.gmra.mxu0 %v549
    %v686 = vpop.f32.mrf.mxu0
    %v687 = vadd.f32 0.0, %v686
    %v688 = vpop.f32.mrf.mxu0
    %689 = vmatprep.mubr.f32.mxu0 0.0
    %690 = vmatmul.mubr.f32.gmra.mxu0 %v551
    %v691 = vpop.f32.mrf.mxu0
    %v692 = vadd.f32 0.0, %v691
    %v693 = vpop.f32.mrf.mxu0
    %694 = vmatprep.mubr.f32.mxu0 0.0
    %695 = vmatmul.mubr.f32.gmra.mxu0 %v553
    %v696 = vpop.f32.mrf.mxu0
    %v697 = vadd.f32 0.0, %v696
    %v698 = vpop.f32.mrf.mxu0
    %699 = vdwg.mxu0
    %v700 = vadd.f32 %v399, %v622
    %v701 = vadd.f32 %v404, %v627
    %v702 = vadd.f32 %v409, %v632
    %v703 = vadd.f32 %v414, %v637
    %v704 = vadd.f32 %v419, %v642
    %v705 = vadd.f32 %v424, %v647
    %v706 = vadd.f32 %v429, %v652
    %v707 = vadd.f32 %v434, %v657
    %v708 = vadd.f32 %v439, %v662
    %v709 = vadd.f32 %v444, %v667
    %v710 = vadd.f32 %v449, %v672
    %v711 = vadd.f32 %v454, %v677
    %v712 = vadd.f32 %v459, %v682
    %v713 = vadd.f32 %v464, %v687
    %v714 = vadd.f32 %v469, %v692
    %v715 = vadd.f32 %v474, %v697
    %vm716 = vcmask 1044480
    %v717 = vrot.slane %v24, 3
    %v718 = vrot.slane %v25, 3
    %v719 = vsel %vm716, %v717, %v718
    %v720 = vrot.slane %v26, 3
    %v721 = vsel %vm716, %v718, %v720
    %v722 = vrot.slane %v27, 3
    %v723 = vrot.slane %v28, 3
    %v724 = vsel %vm716, %v722, %v723
    %v725 = vrot.slane %v29, 3
    %v726 = vsel %vm716, %v723, %v725
    %v727 = vrot.slane %v30, 3
    %v728 = vrot.slane %v31, 3
    %v729 = vsel %vm716, %v727, %v728
    %v730 = vrot.slane %v32, 3
    %v731 = vsel %vm716, %v728, %v730
    %v732 = vrot.slane %v33, 3
    %v733 = vrot.slane %v34, 3
    %v734 = vsel %vm716, %v732, %v733
    %v735 = vrot.slane %v35, 3
    %v736 = vsel %vm716, %v733, %v735
    %v737 = vrot.slane %v36, 3
    %v738 = vrot.slane %v37, 3
    %v739 = vsel %vm716, %v737, %v738
    %v740 = vrot.slane %v38, 3
    %v741 = vsel %vm716, %v738, %v740
    %v742 = vrot.slane %v39, 3
    %v743 = vrot.slane %v40, 3
    %v744 = vsel %vm716, %v742, %v743
    %v745 = vrot.slane %v41, 3
    %v746 = vsel %vm716, %v743, %v745
    %v747 = vrot.slane %v42, 3
    %v748 = vrot.slane %v43, 3
    %v749 = vsel %vm716, %v747, %v748
    %v750 = vrot.slane %v44, 3
    %v751 = vsel %vm716, %v748, %v750
    %v752 = vrot.slane %v45, 3
    %v753 = vrot.slane %v46, 3
    %v754 = vsel %vm716, %v752, %v753
    %v755 = vrot.slane %v47, 3
    %v756 = vsel %vm716, %v753, %v755
    %s757 = scalar_lea.vmem %s1, 96
    %v758 = vld [vmem:[%s757] sm:$0xff]
    %v759 = vld [vmem:[%s757 + $0x8] sm:$0xff]
    %v760 = vld [vmem:[%s757 + $0x10] sm:$0xff]
    %v761 = vld [vmem:[%s757 + $0x18] sm:$0xff]
    %v762 = vsel %vm122, %v719, 0
    %v764 = vsel %vm122, %v721, 0
    %v766 = vsel %vm122, %v724, 0
    %v768 = vsel %vm122, %v726, 0
    %v770 = vsel %vm122, %v729, 0
    %v772 = vsel %vm122, %v731, 0
    %v774 = vsel %vm122, %v734, 0
    %v776 = vsel %vm122, %v736, 0
    %v778 = vsel %vm122, %v739, 0
    %v780 = vsel %vm122, %v741, 0
    %v782 = vsel %vm122, %v744, 0
    %v784 = vsel %vm122, %v746, 0
    %v786 = vsel %vm122, %v749, 0
    %v788 = vsel %vm122, %v751, 0
    %v790 = vsel %vm122, %v754, 0
    %v792 = vsel %vm122, %v756, 0
    %794 = vmatprep.subr.mxu0 0.0
    %795 = vmatpush1.msra.mxu0 0.0
    %796 = vmatprep.subr.mxu0 0.0
    %797 = vmatpush1.msra.mxu0 0.0
    %798 = vmatprep.subr.mxu0 0.0
    %799 = vmatpush1.msra.mxu0 0.0
    %800 = vmatprep.subr.mxu0 0.0
    %801 = vmatpush1.msra.mxu0 0.0
    %802 = vmatprep.subr.mxu0 0.0
    %803 = vmatpush1.msra.mxu0 0.0
    %804 = vmatprep.subr.mxu0 0.0
    %805 = vmatpush1.msra.mxu0 0.0
    %806 = vmatprep.subr.mxu0 0.0
    %807 = vmatpush1.msra.mxu0 0.0
    %808 = vmatprep.subr.mxu0 0.0
    %809 = vmatpush1.msra.mxu0 0.0
    %810 = vmatprep.subr.mxu0 0.0
    %811 = vmatpush1.msra.mxu0 0.0
    %812 = vmatprep.subr.mxu0 0.0
    %813 = vmatpush1.msra.mxu0 0.0
    %814 = vmatprep.subr.mxu0 0.0
    %815 = vmatpush1.msra.mxu0 0.0
    %816 = vmatprep.subr.mxu0 0.0
    %817 = vmatpush1.msra.mxu0 0.0
    %818 = vmatprep.subr.mxu0 0.0
    %819 = vmatpush1.msra.mxu0 %v761
    %820 = vmatprep.subr.mxu0 0.0
    %821 = vmatpush1.msra.mxu0 %v760
    %822 = vmatprep.subr.mxu0 0.0
    %823 = vmatpush1.msra.mxu0 %v759
    %824 = vmatprep.subr.mxu0 0.0
    %825 = vmatpush1.msra.mxu0 %v758
    %826 = vmatprep.subr.mxu0 0.0
    %827 = vmatpush2.msra.mxu0 0.0
    %828 = vmatprep.subr.mxu0 0.0
    %829 = vmatpush2.msra.mxu0 0.0
    %830 = vmatprep.subr.mxu0 0.0
    %831 = vmatpush2.msra.mxu0 0.0
    %832 = vmatprep.subr.mxu0 0.0
    %833 = vmatpush2.msra.mxu0 0.0
    %834 = vmatprep.subr.mxu0 0.0
    %835 = vmatpush2.msra.mxu0 0.0
    %836 = vmatprep.subr.mxu0 0.0
    %837 = vmatpush2.msra.mxu0 0.0
    %838 = vmatprep.subr.mxu0 0.0
    %839 = vmatpush2.msra.mxu0 0.0
    %840 = vmatprep.subr.mxu0 0.0
    %841 = vmatpush2.msra.mxu0 0.0
    %842 = vmatprep.subr.mxu0 0.0
    %843 = vmatpush2.msra.mxu0 0.0
    %844 = vmatprep.subr.mxu0 0.0
    %845 = vmatpush2.msra.mxu0 0.0
    %846 = vmatprep.subr.mxu0 0.0
    %847 = vmatpush2.msra.mxu0 0.0
    %848 = vmatprep.subr.mxu0 0.0
    %849 = vmatpush2.msra.mxu0 0.0
    %850 = vmatprep.subr.mxu0 0.0
    %851 = vmatpush2.msra.mxu0 0.0
    %852 = vmatprep.subr.mxu0 0.0
    %853 = vmatpush2.msra.mxu0 0.0
    %854 = vmatprep.subr.mxu0 0.0
    %855 = vmatpush2.msra.mxu0 0.0
    %856 = vmatprep.subr.mxu0 0.0
    %857 = vmatpush2.msra.mxu0 0.0
    %858 = vmatprep.mubr.f32.mxu0 0.0
    %859 = vmatmul.mubr.f32.gmra.mxu0 %v762
    %v860 = vpop.f32.mrf.mxu0
    %v861 = vadd.f32 0.0, %v860
    %v862 = vpop.f32.mrf.mxu0
    %863 = vmatprep.mubr.f32.mxu0 0.0
    %864 = vmatmul.mubr.f32.gmra.mxu0 %v764
    %v865 = vpop.f32.mrf.mxu0
    %v866 = vadd.f32 0.0, %v865
    %v867 = vpop.f32.mrf.mxu0
    %868 = vmatprep.mubr.f32.mxu0 0.0
    %869 = vmatmul.mubr.f32.gmra.mxu0 %v766
    %v870 = vpop.f32.mrf.mxu0
    %v871 = vadd.f32 0.0, %v870
    %v872 = vpop.f32.mrf.mxu0
    %873 = vmatprep.mubr.f32.mxu0 0.0
    %874 = vmatmul.mubr.f32.gmra.mxu0 %v768
    %v875 = vpop.f32.mrf.mxu0
    %v876 = vadd.f32 0.0, %v875
    %v877 = vpop.f32.mrf.mxu0
    %878 = vmatprep.mubr.f32.mxu0 0.0
    %879 = vmatmul.mubr.f32.gmra.mxu0 %v770
    %v880 = vpop.f32.mrf.mxu0
    %v881 = vadd.f32 0.0, %v880
    %v882 = vpop.f32.mrf.mxu0
    %883 = vmatprep.mubr.f32.mxu0 0.0
    %884 = vmatmul.mubr.f32.gmra.mxu0 %v772
    %v885 = vpop.f32.mrf.mxu0
    %v886 = vadd.f32 0.0, %v885
    %v887 = vpop.f32.mrf.mxu0
    %888 = vmatprep.mubr.f32.mxu0 0.0
    %889 = vmatmul.mubr.f32.gmra.mxu0 %v774
    %v890 = vpop.f32.mrf.mxu0
    %v891 = vadd.f32 0.0, %v890
    %v892 = vpop.f32.mrf.mxu0
    %893 = vmatprep.mubr.f32.mxu0 0.0
    %894 = vmatmul.mubr.f32.gmra.mxu0 %v776
    %v895 = vpop.f32.mrf.mxu0
    %v896 = vadd.f32 0.0, %v895
    %v897 = vpop.f32.mrf.mxu0
    %898 = vmatprep.mubr.f32.mxu0 0.0
    %899 = vmatmul.mubr.f32.gmra.mxu0 %v778
    %v900 = vpop.f32.mrf.mxu0
    %v901 = vadd.f32 0.0, %v900
    %v902 = vpop.f32.mrf.mxu0
    %903 = vmatprep.mubr.f32.mxu0 0.0
    %904 = vmatmul.mubr.f32.gmra.mxu0 %v780
    %v905 = vpop.f32.mrf.mxu0
    %v906 = vadd.f32 0.0, %v905
    %v907 = vpop.f32.mrf.mxu0
    %908 = vmatprep.mubr.f32.mxu0 0.0
    %909 = vmatmul.mubr.f32.gmra.mxu0 %v782
    %v910 = vpop.f32.mrf.mxu0
    %v911 = vadd.f32 0.0, %v910
    %v912 = vpop.f32.mrf.mxu0
    %913 = vmatprep.mubr.f32.mxu0 0.0
    %914 = vmatmul.mubr.f32.gmra.mxu0 %v784
    %v915 = vpop.f32.mrf.mxu0
    %v916 = vadd.f32 0.0, %v915
    %v917 = vpop.f32.mrf.mxu0
    %918 = vmatprep.mubr.f32.mxu0 0.0
    %919 = vmatmul.mubr.f32.gmra.mxu0 %v786
    %v920 = vpop.f32.mrf.mxu0
    %v921 = vadd.f32 0.0, %v920
    %v922 = vpop.f32.mrf.mxu0
    %923 = vmatprep.mubr.f32.mxu0 0.0
    %924 = vmatmul.mubr.f32.gmra.mxu0 %v788
    %v925 = vpop.f32.mrf.mxu0
    %v926 = vadd.f32 0.0, %v925
    %v927 = vpop.f32.mrf.mxu0
    %928 = vmatprep.mubr.f32.mxu0 0.0
    %929 = vmatmul.mubr.f32.gmra.mxu0 %v790
    %v930 = vpop.f32.mrf.mxu0
    %v931 = vadd.f32 0.0, %v930
    %v932 = vpop.f32.mrf.mxu0
    %933 = vmatprep.mubr.f32.mxu0 0.0
    %934 = vmatmul.mubr.f32.gmra.mxu0 %v792
    %v935 = vpop.f32.mrf.mxu0
    %v936 = vadd.f32 0.0, %v935
    %v937 = vpop.f32.mrf.mxu0
    %938 = vdwg.mxu0
    %v939 = vadd.f32 %v700, %v861
    %v940 = vadd.f32 %v701, %v866
    %v941 = vadd.f32 %v702, %v871
    %v942 = vadd.f32 %v703, %v876
    %v943 = vadd.f32 %v704, %v881
    %v944 = vadd.f32 %v705, %v886
    %v945 = vadd.f32 %v706, %v891
    %v946 = vadd.f32 %v707, %v896
    %v947 = vadd.f32 %v708, %v901
    %v948 = vadd.f32 %v709, %v906
    %v949 = vadd.f32 %v710, %v911
    %v950 = vadd.f32 %v711, %v916
    %v951 = vadd.f32 %v712, %v921
    %v952 = vadd.f32 %v713, %v926
    %v953 = vadd.f32 %v714, %v931
    %v954 = vadd.f32 %v715, %v936
    %vm955 = vcmask 1043456
    %v956 = vrot.slane %v24, 4
    %v957 = vrot.slane %v25, 4
    %v958 = vsel %vm955, %v956, %v957
    %v959 = vrot.slane %v26, 4
    %v960 = vsel %vm955, %v957, %v959
    %v961 = vrot.slane %v27, 4
    %v962 = vrot.slane %v28, 4
    %v963 = vsel %vm955, %v961, %v962
    %v964 = vrot.slane %v29, 4
    %v965 = vsel %vm955, %v962, %v964
    %v966 = vrot.slane %v30, 4
    %v967 = vrot.slane %v31, 4
    %v968 = vsel %vm955, %v966, %v967
    %v969 = vrot.slane %v32, 4
    %v970 = vsel %vm955, %v967, %v969
    %v971 = vrot.slane %v33, 4
    %v972 = vrot.slane %v34, 4
    %v973 = vsel %vm955, %v971, %v972
    %v974 = vrot.slane %v35, 4
    %v975 = vsel %vm955, %v972, %v974
    %v976 = vrot.slane %v36, 4
    %v977 = vrot.slane %v37, 4
    %v978 = vsel %vm955, %v976, %v977
    %v979 = vrot.slane %v38, 4
    %v980 = vsel %vm955, %v977, %v979
    %v981 = vrot.slane %v39, 4
    %v982 = vrot.slane %v40, 4
    %v983 = vsel %vm955, %v981, %v982
    %v984 = vrot.slane %v41, 4
    %v985 = vsel %vm955, %v982, %v984
    %v986 = vrot.slane %v42, 4
    %v987 = vrot.slane %v43, 4
    %v988 = vsel %vm955, %v986, %v987
    %v989 = vrot.slane %v44, 4
    %v990 = vsel %vm955, %v987, %v989
    %v991 = vrot.slane %v45, 4
    %v992 = vrot.slane %v46, 4
    %v993 = vsel %vm955, %v991, %v992
    %v994 = vrot.slane %v47, 4
    %v995 = vsel %vm955, %v992, %v994
    %s996 = scalar_lea.vmem %s1, 128
    %v997 = vld [vmem:[%s996] sm:$0xff]
    %v998 = vld [vmem:[%s996 + $0x8] sm:$0xff]
    %v999 = vld [vmem:[%s996 + $0x10] sm:$0xff]
    %v1000 = vld [vmem:[%s996 + $0x18] sm:$0xff]
    %v1001 = vsel %vm122, %v958, 0
    %v1003 = vsel %vm122, %v960, 0
    %v1005 = vsel %vm122, %v963, 0
    %v1007 = vsel %vm122, %v965, 0
    %v1009 = vsel %vm122, %v968, 0
    %v1011 = vsel %vm122, %v970, 0
    %v1013 = vsel %vm122, %v973, 0
    %v1015 = vsel %vm122, %v975, 0
    %v1017 = vsel %vm122, %v978, 0
    %v1019 = vsel %vm122, %v980, 0
    %v1021 = vsel %vm122, %v983, 0
    %v1023 = vsel %vm122, %v985, 0
    %v1025 = vsel %vm122, %v988, 0
    %v1027 = vsel %vm122, %v990, 0
    %v1029 = vsel %vm122, %v993, 0
    %v1031 = vsel %vm122, %v995, 0
    %1033 = vmatprep.subr.mxu0 0.0
    %1034 = vmatpush1.msra.mxu0 0.0
    %1035 = vmatprep.subr.mxu0 0.0
    %1036 = vmatpush1.msra.mxu0 0.0
    %1037 = vmatprep.subr.mxu0 0.0
    %1038 = vmatpush1.msra.mxu0 0.0
    %1039 = vmatprep.subr.mxu0 0.0
    %1040 = vmatpush1.msra.mxu0 0.0
    %1041 = vmatprep.subr.mxu0 0.0
    %1042 = vmatpush1.msra.mxu0 0.0
    %1043 = vmatprep.subr.mxu0 0.0
    %1044 = vmatpush1.msra.mxu0 0.0
    %1045 = vmatprep.subr.mxu0 0.0
    %1046 = vmatpush1.msra.mxu0 0.0
    %1047 = vmatprep.subr.mxu0 0.0
    %1048 = vmatpush1.msra.mxu0 0.0
    %1049 = vmatprep.subr.mxu0 0.0
    %1050 = vmatpush1.msra.mxu0 0.0
    %1051 = vmatprep.subr.mxu0 0.0
    %1052 = vmatpush1.msra.mxu0 0.0
    %1053 = vmatprep.subr.mxu0 0.0
    %1054 = vmatpush1.msra.mxu0 0.0
    %1055 = vmatprep.subr.mxu0 0.0
    %1056 = vmatpush1.msra.mxu0 0.0
    %1057 = vmatprep.subr.mxu0 0.0
    %1058 = vmatpush1.msra.mxu0 %v1000
    %1059 = vmatprep.subr.mxu0 0.0
    %1060 = vmatpush1.msra.mxu0 %v999
    %1061 = vmatprep.subr.mxu0 0.0
    %1062 = vmatpush1.msra.mxu0 %v998
    %1063 = vmatprep.subr.mxu0 0.0
    %1064 = vmatpush1.msra.mxu0 %v997
    %1065 = vmatprep.subr.mxu0 0.0
    %1066 = vmatpush2.msra.mxu0 0.0
    %1067 = vmatprep.subr.mxu0 0.0
    %1068 = vmatpush2.msra.mxu0 0.0
    %1069 = vmatprep.subr.mxu0 0.0
    %1070 = vmatpush2.msra.mxu0 0.0
    %1071 = vmatprep.subr.mxu0 0.0
    %1072 = vmatpush2.msra.mxu0 0.0
    %1073 = vmatprep.subr.mxu0 0.0
    %1074 = vmatpush2.msra.mxu0 0.0
    %1075 = vmatprep.subr.mxu0 0.0
    %1076 = vmatpush2.msra.mxu0 0.0
    %1077 = vmatprep.subr.mxu0 0.0
    %1078 = vmatpush2.msra.mxu0 0.0
    %1079 = vmatprep.subr.mxu0 0.0
    %1080 = vmatpush2.msra.mxu0 0.0
    %1081 = vmatprep.subr.mxu0 0.0
    %1082 = vmatpush2.msra.mxu0 0.0
    %1083 = vmatprep.subr.mxu0 0.0
    %1084 = vmatpush2.msra.mxu0 0.0
    %1085 = vmatprep.subr.mxu0 0.0
    %1086 = vmatpush2.msra.mxu0 0.0
    %1087 = vmatprep.subr.mxu0 0.0
    %1088 = vmatpush2.msra.mxu0 0.0
    %1089 = vmatprep.subr.mxu0 0.0
    %1090 = vmatpush2.msra.mxu0 0.0
    %1091 = vmatprep.subr.mxu0 0.0
    %1092 = vmatpush2.msra.mxu0 0.0
    %1093 = vmatprep.subr.mxu0 0.0
    %1094 = vmatpush2.msra.mxu0 0.0
    %1095 = vmatprep.subr.mxu0 0.0
    %1096 = vmatpush2.msra.mxu0 0.0
    %1097 = vmatprep.mubr.f32.mxu0 0.0
    %1098 = vmatmul.mubr.f32.gmra.mxu0 %v1001
    %v1099 = vpop.f32.mrf.mxu0
    %v1100 = vadd.f32 0.0, %v1099
    %v1101 = vpop.f32.mrf.mxu0
    %1102 = vmatprep.mubr.f32.mxu0 0.0
    %1103 = vmatmul.mubr.f32.gmra.mxu0 %v1003
    %v1104 = vpop.f32.mrf.mxu0
    %v1105 = vadd.f32 0.0, %v1104
    %v1106 = vpop.f32.mrf.mxu0
    %1107 = vmatprep.mubr.f32.mxu0 0.0
    %1108 = vmatmul.mubr.f32.gmra.mxu0 %v1005
    %v1109 = vpop.f32.mrf.mxu0
    %v1110 = vadd.f32 0.0, %v1109
    %v1111 = vpop.f32.mrf.mxu0
    %1112 = vmatprep.mubr.f32.mxu0 0.0
    %1113 = vmatmul.mubr.f32.gmra.mxu0 %v1007
    %v1114 = vpop.f32.mrf.mxu0
    %v1115 = vadd.f32 0.0, %v1114
    %v1116 = vpop.f32.mrf.mxu0
    %1117 = vmatprep.mubr.f32.mxu0 0.0
    %1118 = vmatmul.mubr.f32.gmra.mxu0 %v1009
    %v1119 = vpop.f32.mrf.mxu0
    %v1120 = vadd.f32 0.0, %v1119
    %v1121 = vpop.f32.mrf.mxu0
    %1122 = vmatprep.mubr.f32.mxu0 0.0
    %1123 = vmatmul.mubr.f32.gmra.mxu0 %v1011
    %v1124 = vpop.f32.mrf.mxu0
    %v1125 = vadd.f32 0.0, %v1124
    %v1126 = vpop.f32.mrf.mxu0
    %1127 = vmatprep.mubr.f32.mxu0 0.0
    %1128 = vmatmul.mubr.f32.gmra.mxu0 %v1013
    %v1129 = vpop.f32.mrf.mxu0
    %v1130 = vadd.f32 0.0, %v1129
    %v1131 = vpop.f32.mrf.mxu0
    %1132 = vmatprep.mubr.f32.mxu0 0.0
    %1133 = vmatmul.mubr.f32.gmra.mxu0 %v1015
    %v1134 = vpop.f32.mrf.mxu0
    %v1135 = vadd.f32 0.0, %v1134
    %v1136 = vpop.f32.mrf.mxu0
    %1137 = vmatprep.mubr.f32.mxu0 0.0
    %1138 = vmatmul.mubr.f32.gmra.mxu0 %v1017
    %v1139 = vpop.f32.mrf.mxu0
    %v1140 = vadd.f32 0.0, %v1139
    %v1141 = vpop.f32.mrf.mxu0
    %1142 = vmatprep.mubr.f32.mxu0 0.0
    %1143 = vmatmul.mubr.f32.gmra.mxu0 %v1019
    %v1144 = vpop.f32.mrf.mxu0
    %v1145 = vadd.f32 0.0, %v1144
    %v1146 = vpop.f32.mrf.mxu0
    %1147 = vmatprep.mubr.f32.mxu0 0.0
    %1148 = vmatmul.mubr.f32.gmra.mxu0 %v1021
    %v1149 = vpop.f32.mrf.mxu0
    %v1150 = vadd.f32 0.0, %v1149
    %v1151 = vpop.f32.mrf.mxu0
    %1152 = vmatprep.mubr.f32.mxu0 0.0
    %1153 = vmatmul.mubr.f32.gmra.mxu0 %v1023
    %v1154 = vpop.f32.mrf.mxu0
    %v1155 = vadd.f32 0.0, %v1154
    %v1156 = vpop.f32.mrf.mxu0
    %1157 = vmatprep.mubr.f32.mxu0 0.0
    %1158 = vmatmul.mubr.f32.gmra.mxu0 %v1025
    %v1159 = vpop.f32.mrf.mxu0
    %v1160 = vadd.f32 0.0, %v1159
    %v1161 = vpop.f32.mrf.mxu0
    %1162 = vmatprep.mubr.f32.mxu0 0.0
    %1163 = vmatmul.mubr.f32.gmra.mxu0 %v1027
    %v1164 = vpop.f32.mrf.mxu0
    %v1165 = vadd.f32 0.0, %v1164
    %v1166 = vpop.f32.mrf.mxu0
    %1167 = vmatprep.mubr.f32.mxu0 0.0
    %1168 = vmatmul.mubr.f32.gmra.mxu0 %v1029
    %v1169 = vpop.f32.mrf.mxu0
    %v1170 = vadd.f32 0.0, %v1169
    %v1171 = vpop.f32.mrf.mxu0
    %1172 = vmatprep.mubr.f32.mxu0 0.0
    %1173 = vmatmul.mubr.f32.gmra.mxu0 %v1031
    %v1174 = vpop.f32.mrf.mxu0
    %v1175 = vadd.f32 0.0, %v1174
    %v1176 = vpop.f32.mrf.mxu0
    %1177 = vdwg.mxu0
    %v1178 = vadd.f32 %v939, %v1100
    %v1179 = vadd.f32 %v940, %v1105
    %v1180 = vadd.f32 %v941, %v1110
    %v1181 = vadd.f32 %v942, %v1115
    %v1182 = vadd.f32 %v943, %v1120
    %v1183 = vadd.f32 %v944, %v1125
    %v1184 = vadd.f32 %v945, %v1130
    %v1185 = vadd.f32 %v946, %v1135
    %v1186 = vadd.f32 %v947, %v1140
    %v1187 = vadd.f32 %v948, %v1145
    %v1188 = vadd.f32 %v949, %v1150
    %v1189 = vadd.f32 %v950, %v1155
    %v1190 = vadd.f32 %v951, %v1160
    %v1191 = vadd.f32 %v952, %v1165
    %v1192 = vadd.f32 %v953, %v1170
    %v1193 = vadd.f32 %v954, %v1175
    %v1194 = vld [vmem:[%s2] sm:$0x1]
    %v1196 = vlaneseq
    %v1197 = vshrl.u32 %v1196, 7
    %v1198 = vsub.s32 0, %v1197
    %v1199 = vrot.slane %v1194, %v1198
    %v1201 = vadd.f32 %v1178, %v1199
    %v1202 = vadd.f32 %v1179, %v1199
    %v1203 = vadd.f32 %v1180, %v1199
    %v1204 = vadd.f32 %v1181, %v1199
    %v1205 = vadd.f32 %v1182, %v1199
    %v1206 = vadd.f32 %v1183, %v1199
    %v1207 = vadd.f32 %v1184, %v1199
    %v1208 = vadd.f32 %v1185, %v1199
    %v1209 = vadd.f32 %v1186, %v1199
    %v1210 = vadd.f32 %v1187, %v1199
    %v1211 = vadd.f32 %v1188, %v1199
    %v1212 = vadd.f32 %v1189, %v1199
    %v1213 = vadd.f32 %v1190, %v1199
    %v1214 = vadd.f32 %v1191, %v1199
    %v1215 = vadd.f32 %v1192, %v1199
    %v1216 = vadd.f32 %v1193, %v1199
    %v1217 = vmax.f32 %v1201, 0.0
    %v1218 = vmax.f32 %v1202, 0.0
    %v1219 = vmax.f32 %v1203, 0.0
    %v1220 = vmax.f32 %v1204, 0.0
    %v1221 = vmax.f32 %v1205, 0.0
    %v1222 = vmax.f32 %v1206, 0.0
    %v1223 = vmax.f32 %v1207, 0.0
    %v1224 = vmax.f32 %v1208, 0.0
    %v1225 = vmax.f32 %v1209, 0.0
    %v1226 = vmax.f32 %v1210, 0.0
    %v1227 = vmax.f32 %v1211, 0.0
    %v1228 = vmax.f32 %v1212, 0.0
    %v1229 = vmax.f32 %v1213, 0.0
    %v1230 = vmax.f32 %v1214, 0.0
    %v1231 = vmax.f32 %v1215, 0.0
    %v1232 = vmax.f32 %v1216, 0.0
    %v1233 = vld [vmem:[%s3] sm:$0xff]
    %v1234 = vld [vmem:[%s3 + $0x8] sm:$0xff]
    %v1235 = vmul.f32 %v1217, %v1233
    %v1236 = vmul.f32 %v1218, %v1234
    %v1237 = vmul.f32 %v1219, %v1233
    %v1238 = vmul.f32 %v1220, %v1234
    %v1239 = vmul.f32 %v1221, %v1233
    %v1240 = vmul.f32 %v1222, %v1234
    %v1241 = vmul.f32 %v1223, %v1233
    %v1242 = vmul.f32 %v1224, %v1234
    %v1243 = vmul.f32 %v1225, %v1233
    %v1244 = vmul.f32 %v1226, %v1234
    %v1245 = vmul.f32 %v1227, %v1233
    %v1246 = vmul.f32 %v1228, %v1234
    %v1247 = vmul.f32 %v1229, %v1233
    %v1248 = vmul.f32 %v1230, %v1234
    %v1249 = vmul.f32 %v1231, %v1233
    %v1250 = vmul.f32 %v1232, %v1234
    %v1251 = vmax.f32 %v1235, %v1236
    %v1252 = vrot.slane %v1251, 4
    %v1253 = vmax.f32 %v1251, %v1252
    %v1254 = vrot.slane %v1253, 2
    %v1255 = vmax.f32 %v1253, %v1254
    %v1256 = vrot.slane %v1255, 1
    %v1257 = vmax.f32 %v1255, %v1256
    %v1258 = vmax.f32 %v1237, %v1238
    %v1259 = vrot.slane %v1258, 4
    %v1260 = vmax.f32 %v1258, %v1259
    %v1261 = vrot.slane %v1260, 2
    %v1262 = vmax.f32 %v1260, %v1261
    %v1263 = vrot.slane %v1262, 1
    %v1264 = vmax.f32 %v1262, %v1263
    %v1265 = vmax.f32 %v1239, %v1240
    %v1266 = vrot.slane %v1265, 4
    %v1267 = vmax.f32 %v1265, %v1266
    %v1268 = vrot.slane %v1267, 2
    %v1269 = vmax.f32 %v1267, %v1268
    %v1270 = vrot.slane %v1269, 1
    %v1271 = vmax.f32 %v1269, %v1270
    %v1272 = vmax.f32 %v1241, %v1242
    %v1273 = vrot.slane %v1272, 4
    %v1274 = vmax.f32 %v1272, %v1273
    %v1275 = vrot.slane %v1274, 2
    %v1276 = vmax.f32 %v1274, %v1275
    %v1277 = vrot.slane %v1276, 1
    %v1278 = vmax.f32 %v1276, %v1277
    %v1279 = vmax.f32 %v1243, %v1244
    %v1280 = vrot.slane %v1279, 4
    %v1281 = vmax.f32 %v1279, %v1280
    %v1282 = vrot.slane %v1281, 2
    %v1283 = vmax.f32 %v1281, %v1282
    %v1284 = vrot.slane %v1283, 1
    %v1285 = vmax.f32 %v1283, %v1284
    %v1286 = vmax.f32 %v1245, %v1246
    %v1287 = vrot.slane %v1286, 4
    %v1288 = vmax.f32 %v1286, %v1287
    %v1289 = vrot.slane %v1288, 2
    %v1290 = vmax.f32 %v1288, %v1289
    %v1291 = vrot.slane %v1290, 1
    %v1292 = vmax.f32 %v1290, %v1291
    %v1293 = vmax.f32 %v1247, %v1248
    %v1294 = vrot.slane %v1293, 4
    %v1295 = vmax.f32 %v1293, %v1294
    %v1296 = vrot.slane %v1295, 2
    %v1297 = vmax.f32 %v1295, %v1296
    %v1298 = vrot.slane %v1297, 1
    %v1299 = vmax.f32 %v1297, %v1298
    %v1300 = vmax.f32 %v1249, %v1250
    %v1301 = vrot.slane %v1300, 4
    %v1302 = vmax.f32 %v1300, %v1301
    %v1303 = vrot.slane %v1302, 2
    %v1304 = vmax.f32 %v1302, %v1303
    %v1305 = vrot.slane %v1304, 1
    %v1306 = vmax.f32 %v1304, %v1305
    %v1307 = vld [vmem:[%s4] sm:$0xff]
    %v1308 = vld [vmem:[%s4 + $0x8] sm:$0xff]
    %v1309 = vld [vmem:[%s4 + $0x10] sm:$0xff]
    %v1310 = vld [vmem:[%s4 + $0x18] sm:$0xff]
    %v1311 = vld [vmem:[%s4 + $0x20] sm:$0xff]
    %v1312 = vld [vmem:[%s4 + $0x28] sm:$0xff]
    %v1313 = vld [vmem:[%s4 + $0x30] sm:$0xff]
    %v1314 = vld [vmem:[%s4 + $0x38] sm:$0xff]
    %v1315 = vld [vmem:[%s4 + $0x40] sm:$0xff]
    %v1316 = vld [vmem:[%s4 + $0x48] sm:$0xff]
    %v1317 = vld [vmem:[%s4 + $0x50] sm:$0xff]
    %v1318 = vld [vmem:[%s4 + $0x58] sm:$0xff]
    %v1319 = vld [vmem:[%s4 + $0x60] sm:$0xff]
    %v1320 = vld [vmem:[%s4 + $0x68] sm:$0xff]
    %v1321 = vld [vmem:[%s4 + $0x70] sm:$0xff]
    %v1322 = vld [vmem:[%s4 + $0x78] sm:$0xff]
    %v1323 = vld [vmem:[%s5] sm:$0x1]
    %v1325 = vlaneseq
    %v1326 = vshrl.u32 %v1325, 7
    %v1327 = vsub.s32 0, %v1326
    %v1328 = vrot.slane %v1323, %v1327
    %vm1338 = vcmask 1041409
    %v1339 = vsel %vm1338, %v1264, %v1257
    %vm1340 = vcmask 1042434
    %v1341 = vsel %vm1340, %v1271, %v1339
    %vm1342 = vcmask 1043459
    %v1343 = vsel %vm1342, %v1278, %v1341
    %vm1344 = vcmask 1044484
    %v1345 = vsel %vm1344, %v1285, %v1343
    %vm1346 = vcmask 1045509
    %v1347 = vsel %vm1346, %v1292, %v1345
    %vm1348 = vcmask 1046534
    %v1349 = vsel %vm1348, %v1299, %v1347
    %vm1350 = vcmask 1047559
    %v1351 = vsel %vm1350, %v1306, %v1349
    %1353 = vmatprep.subr.mxu0 0.0
    %1354 = vmatpush1.msra.mxu0 %v1322
    %1355 = vmatprep.subr.mxu0 0.0
    %1356 = vmatpush1.msra.mxu0 %v1321
    %1357 = vmatprep.subr.mxu0 0.0
    %1358 = vmatpush1.msra.mxu0 %v1320
    %1359 = vmatprep.subr.mxu0 0.0
    %1360 = vmatpush1.msra.mxu0 %v1319
    %1361 = vmatprep.subr.mxu0 0.0
    %1362 = vmatpush1.msra.mxu0 %v1318
    %1363 = vmatprep.subr.mxu0 0.0
    %1364 = vmatpush1.msra.mxu0 %v1317
    %1365 = vmatprep.subr.mxu0 0.0
    %1366 = vmatpush1.msra.mxu0 %v1316
    %1367 = vmatprep.subr.mxu0 0.0
    %1368 = vmatpush1.msra.mxu0 %v1315
    %1369 = vmatprep.subr.mxu0 0.0
    %1370 = vmatpush1.msra.mxu0 %v1314
    %1371 = vmatprep.subr.mxu0 0.0
    %1372 = vmatpush1.msra.mxu0 %v1313
    %1373 = vmatprep.subr.mxu0 0.0
    %1374 = vmatpush1.msra.mxu0 %v1312
    %1375 = vmatprep.subr.mxu0 0.0
    %1376 = vmatpush1.msra.mxu0 %v1311
    %1377 = vmatprep.subr.mxu0 0.0
    %1378 = vmatpush1.msra.mxu0 %v1310
    %1379 = vmatprep.subr.mxu0 0.0
    %1380 = vmatpush1.msra.mxu0 %v1309
    %1381 = vmatprep.subr.mxu0 0.0
    %1382 = vmatpush1.msra.mxu0 %v1308
    %1383 = vmatprep.subr.mxu0 0.0
    %1384 = vmatpush1.msra.mxu0 %v1307
    %1385 = vmatprep.subr.mxu0 0.0
    %1386 = vmatpush2.msra.mxu0 0.0
    %1387 = vmatprep.subr.mxu0 0.0
    %1388 = vmatpush2.msra.mxu0 0.0
    %1389 = vmatprep.subr.mxu0 0.0
    %1390 = vmatpush2.msra.mxu0 0.0
    %1391 = vmatprep.subr.mxu0 0.0
    %1392 = vmatpush2.msra.mxu0 0.0
    %1393 = vmatprep.subr.mxu0 0.0
    %1394 = vmatpush2.msra.mxu0 0.0
    %1395 = vmatprep.subr.mxu0 0.0
    %1396 = vmatpush2.msra.mxu0 0.0
    %1397 = vmatprep.subr.mxu0 0.0
    %1398 = vmatpush2.msra.mxu0 0.0
    %1399 = vmatprep.subr.mxu0 0.0
    %1400 = vmatpush2.msra.mxu0 0.0
    %1401 = vmatprep.subr.mxu0 0.0
    %1402 = vmatpush2.msra.mxu0 0.0
    %1403 = vmatprep.subr.mxu0 0.0
    %1404 = vmatpush2.msra.mxu0 0.0
    %1405 = vmatprep.subr.mxu0 0.0
    %1406 = vmatpush2.msra.mxu0 0.0
    %1407 = vmatprep.subr.mxu0 0.0
    %1408 = vmatpush2.msra.mxu0 0.0
    %1409 = vmatprep.subr.mxu0 0.0
    %1410 = vmatpush2.msra.mxu0 0.0
    %1411 = vmatprep.subr.mxu0 0.0
    %1412 = vmatpush2.msra.mxu0 0.0
    %1413 = vmatprep.subr.mxu0 0.0
    %1414 = vmatpush2.msra.mxu0 0.0
    %1415 = vmatprep.subr.mxu0 0.0
    %1416 = vmatpush2.msra.mxu0 0.0
    %1417 = vmatprep.mubr.f32.mxu0 0.0
    %1418 = vmatmul.mubr.f32.gmra.mxu0 %v1351
    %v1419 = vpop.f32.mrf.mxu0
    %v1420 = vadd.f32 %v1328, %v1419
    %v1421 = vpop.f32.mrf.mxu0
    %1422 = vdwg.mxu0
    %1423 = vst [vmem:[#allocation2] sm:$0xff] %v1420
    // Predicated region
    $region26: #{tpu_custom_call.1} parent=1 // pred_check
      _
    $region27: #{tpu_custom_call.1} parent=1 // pred_check_branch
      %1425 = sbr.rel (0) target = $region29
    $region28: #{tpu_custom_call.1} parent=1 // pred_region
      %s1427 = ssub.s32 128, 128
      %1428 = vsyncadd [#allocation3], %s1427
      %s1430 = sshll.u32 [#allocation2], 4
      %s1431 = int_to_ptr.vmem [resolvable:$true] %s1430
      %1433 = dma.vmem_to_hbm [thread:$0]  %s1431, 128, %s6, [#allocation3]
    $region29: #{tpu_custom_call.1} parent=1 // pred_fallthru
      _
    // Predicated region
    $region30: #{tpu_custom_call.1} parent=1 // pred_check
      _
    $region31: #{tpu_custom_call.1} parent=1 // pred_check_branch
      %1435 = sbr.rel (0) target = $region33
    $region32: #{tpu_custom_call.1} parent=1 // pred_region
      %1436 = dma.done [#allocation3], 128
    $region33: #{tpu_custom_call.1} parent=1 // pred_fallthru
      _
    %1437 = vsyncpa [#allocation3], 1

</llo_original>
